<compile_context>
chip_gen: v6e
topology: v6e:2x2x1
jax: 0.10.0
libtpu: 0.0.40
codegen_flags: <defaults>
</compile_context>

<pallas_src>
import functools

import jax
import jax.numpy as jnp
from jax import lax
from jax.experimental import pallas as pl
from jax.experimental.pallas import tpu as pltpu


# ----------------------------------------------------------------------------
# Pallas kernel: LSTM recurrence + fc1 + ReLU + BatchNorm1d + fc2 + sigmoid
# ----------------------------------------------------------------------------
def _lstm_head_kernel(
    feats_ref,   # (seq, B_pad, F)   f32  time-major features
    h0_ref,      # (B_pad, H)        f32
    c0_ref,      # (B_pad, H)        f32
    w_ih_ref,    # (F, 4H)           f32  fused input->gates weights  [i|f|o|g]
    w_hh_ref,    # (H, 4H)           f32  fused hidden->gates weights [i|f|o|g]
    bg_ref,      # (1, 4H)           f32  b_ih + b_hh                 [i|f|o|g]
    w1_ref,      # (H, O)            f32  fc1 weight
    b1_ref,      # (1, O)            f32  fc1 bias
    gamma_ref,   # (1, O)            f32  BN weight
    beta_ref,    # (1, O)            f32  BN bias
    w2_ref,      # (O, 128)          f32  fc2 column tiled across 128 lanes
    b2_ref,      # (1, 128)          f32  fc2 bias tiled across 128 lanes
    out_ref,     # (B_pad, 128)      f32  sigmoid(fc2(...)) of last timestep
    hs_ref,      # scratch (seq, B_pad, H) f32   per-step hidden states
    *,
    n_valid,     # static: real batch size (batch rows >= n_valid are padding)
    eps,         # static: BatchNorm eps
):
    seq, b_pad, feat = feats_ref.shape
    hidden = h0_ref.shape[-1]

    # ---- loop-invariant casts -------------------------------------------------
    w_hh_b = w_hh_ref[...].astype(jnp.bfloat16)

    # ---- batched input projection: ONE MXU matmul for all timesteps ----------
    # (gate bias folded in here, so the loop never touches it)
    xp = (
        jnp.dot(
            feats_ref[...].reshape(seq * b_pad, feat).astype(jnp.bfloat16),
            w_ih_ref[...].astype(jnp.bfloat16),
            preferred_element_type=jnp.float32,
        )
        + bg_ref[...]
    )

    # ---- serial recurrence: h/c carried as values (vregs), one h@W_hh / step --
    h = h0_ref[...]
    c = c0_ref[...]
    for t in range(seq):                       # seq is small & static: full unroll
        gates = xp[t * b_pad:(t + 1) * b_pad, :] + jnp.dot(
            h.astype(jnp.bfloat16), w_hh_b, preferred_element_type=jnp.float32
        )
        # gates packed [i | f | o | g]: one sigmoid push, one tanh push.
        sig = jax.nn.sigmoid(gates[:, 0:3 * hidden])
        g_g = jnp.tanh(gates[:, 3 * hidden:4 * hidden])
        i_g = sig[:, 0:hidden]
        f_g = sig[:, hidden:2 * hidden]
        o_g = sig[:, 2 * hidden:3 * hidden]
        c = f_g * c + i_g * g_g
        h = o_g * jnp.tanh(c)
        hs_ref[t] = h                          # single tiny vst per step

    # ---- hoisted fc1 + ReLU + masked BN statistics (one batched pass) --------
    w1_b = w1_ref[...].astype(jnp.bfloat16)
    hs2d = hs_ref[...].reshape(seq * b_pad, hidden)
    act = jnp.maximum(
        jnp.dot(hs2d.astype(jnp.bfloat16), w1_b,
                preferred_element_type=jnp.float32) + b1_ref[...],
        0.0,
    )

    # row r corresponds to batch index (r mod b_pad); exclude padded rows.
    rows = lax.broadcasted_iota(jnp.int32, (seq * b_pad, 1), 0)
    valid = (jnp.bitwise_and(rows, b_pad - 1) < n_valid).astype(jnp.float32)
    act_m = act * valid

    inv_n = 1.0 / float(n_valid * seq)
    mean = jnp.sum(act_m, axis=0, keepdims=True) * inv_n
    var = jnp.maximum(
        jnp.sum(act_m * act_m, axis=0, keepdims=True) * inv_n - mean * mean, 0.0
    )                                           # biased var (PyTorch BN), >= 0

    # ---- BN(last timestep) -> fc2 -> sigmoid, lane-dense store ---------------
    a_last = act[(seq - 1) * b_pad:seq * b_pad, :]
    a_norm = (a_last - mean) * lax.rsqrt(var + eps) * gamma_ref[...] + beta_ref[...]
    logits = jnp.dot(
        a_norm.astype(jnp.bfloat16),
        w2_ref[...].astype(jnp.bfloat16),
        preferred_element_type=jnp.float32,
    ) + b2_ref[...]
    out_ref[...] = jax.nn.sigmoid(logits)      # unmasked (B_pad, 128) vreg write


# ----------------------------------------------------------------------------
# Wrapper around pallas_call
# ----------------------------------------------------------------------------
def lstm_head_forward(feats, h0, c0, p, *, b_pad=8, eps=1e-5):
    """feats: (B, seq, F) f32 ; h0, c0: (B, H). Returns (B, 1) sigmoid output."""
    B, seq, _ = feats.shape
    H = h0.shape[-1]
    assert B <= b_pad and (b_pad & (b_pad - 1)) == 0

    # time-major, batch padded to 8 sublanes
    feats_tm = jnp.transpose(feats, (1, 0, 2))
    feats_tm = jnp.pad(feats_tm, ((0, 0), (0, b_pad - B), (0, 0)))
    h0p = jnp.pad(h0, ((0, b_pad - B), (0, 0)))
    c0p = jnp.pad(c0, ((0, b_pad - B), (0, 0)))

    kernel = functools.partial(_lstm_head_kernel, n_valid=B, eps=eps)
    vmem_spec = pl.BlockSpec(memory_space=pltpu.MemorySpace.VMEM)

    out = pl.pallas_call(
        kernel,
        out_shape=jax.ShapeDtypeStruct((b_pad, 128), jnp.float32),
        in_specs=[vmem_spec] * 12,
        out_specs=vmem_spec,
        scratch_shapes=[
            pltpu.VMEM((seq, b_pad, H), jnp.float32),   # per-step hidden states
        ],
        compiler_params=pltpu.CompilerParams(
            vmem_limit_bytes=32 * 1024 * 1024,
        ),
    )(feats_tm, h0p, c0p, p["w_ih"], p["w_hh"], p["b_gates"],
      p["w1"], p["b1"], p["gamma"], p["beta"], p["w2_tiled"], p["b2_tiled"])

    return out[:B, 0:1]


# ----------------------------------------------------------------------------
# Medium.forward (save_hidden=False path)
# ----------------------------------------------------------------------------
def medium_forward(x, h0, c0, params, *, hrs_back):
    """x: (B, seq, C, T) raw input. Mirrors Medium.forward (training-mode BN)."""
    B = x.shape[0]
    seq = hrs_back + 1
    C, T = x.shape[2], x.shape[3]
    x2 = x.reshape(B * seq, C, T)

    # TODO(synk): the real `min_model` is an external CNN loaded with
    # torch.load(min_model_path) (with fc2/bn5/sigmoid/fc3 set to Identity);
    # it cannot be reproduced here.  Stand-in: mean-pool over the sample axis
    # followed by Linear(C -> 32) + ReLU, left to XLA since at real
    # sample_trim it is HBM-bandwidth-bound, not kernel-bound.
    pooled = jnp.mean(x2, axis=-1)                                   # (B*seq, C)
    feats = jnp.maximum(pooled @ params["w_min"] + params["b_min"], 0.0)
    feats = feats.reshape(B, seq, -1)                                # (B, seq, 32)

    return lstm_head_forward(feats, h0, c0, params)                  # (B, 1)


# ----------------------------------------------------------------------------
# Pure-JAX reference (same bf16 matmul rounding, same [i|f|o|g] gate packing)
# ----------------------------------------------------------------------------
def reference_forward(x, h0, c0, p, *, hrs_back, eps=1e-5):
    B = x.shape[0]
    seq = hrs_back + 1
    x2 = x.reshape(B * seq, x.shape[2], x.shape[3])
    pooled = jnp.mean(x2, axis=-1)
    feats = jnp.maximum(pooled @ p["w_min"] + p["b_min"], 0.0).reshape(B, seq, -1)

    def mm(a, b):
        return jnp.dot(a.astype(jnp.bfloat16), b.astype(jnp.bfloat16),
                       preferred_element_type=jnp.float32)

    F = feats.shape[-1]
    H = h0.shape[-1]
    xp = (mm(feats.reshape(B * seq, F), p["w_ih"]) + p["b_gates"]).reshape(
        B, seq, 4 * H)
    h, c = h0, c0
    hs = []
    for t in range(seq):
        gates = xp[:, t] + mm(h, p["w_hh"])
        i = jax.nn.sigmoid(gates[:, 0:H])
        f = jax.nn.sigmoid(gates[:, H:2 * H])
        o = jax.nn.sigmoid(gates[:, 2 * H:3 * H])
        g = jnp.tanh(gates[:, 3 * H:4 * H])
        c = f * c + i * g
        h = o * jnp.tanh(c)
        hs.append(h)
    hseq = jnp.stack(hs, axis=1)                                  # (B, seq, H)

    a = jnp.maximum(mm(hseq.reshape(B * seq, H), p["w1"]) + p["b1"], 0.0)
    mean = jnp.mean(a, axis=0, keepdims=True)
    var = jnp.maximum(jnp.mean(a * a, axis=0, keepdims=True) - mean * mean, 0.0)
    a_last = a.reshape(B, seq, -1)[:, -1]
    a_norm = (a_last - mean) * lax.rsqrt(var + eps) * p["gamma"] + p["beta"]
    logit = mm(a_norm, p["w2"]) + p["b2"]
    return jax.nn.sigmoid(logit)                                  # (B, 1)


# ----------------------------------------------------------------------------
# Parameters (gate matrices packed [i | f | o | g]; fc2 pre-tiled lane-dense)
# ----------------------------------------------------------------------------
def init_params(key, C=16, F=32, H=16, O=16):
    ks = jax.random.split(key, 11)

    def u(k, shape, scale):
        return jax.random.uniform(k, shape, jnp.float32, -scale, scale)

    p = {}
    p["w_min"] = u(ks[0], (C, F), 1.0 / (C ** 0.5))
    p["b_min"] = u(ks[1], (F,), 0.1)
    # NOTE: a real torch LSTM stores gates as [i|f|g|o]; here we pack [i|f|o|g]
    # so one sigmoid covers the first 3H lanes and one tanh the last H lanes.
    p["w_ih"] = u(ks[2], (F, 4 * H), 1.0 / (F ** 0.5))
    p["w_hh"] = u(ks[3], (H, 4 * H), 1.0 / (H ** 0.5))
    p["b_gates"] = u(ks[4], (1, 4 * H), 1.0 / (H ** 0.5))   # b_ih + b_hh fused
    p["w1"] = u(ks[5], (H, O), 1.0 / (H ** 0.5))
    p["b1"] = u(ks[6], (1, O), 1.0 / (H ** 0.5))
    p["gamma"] = 1.0 + 0.1 * jax.random.normal(ks[7], (1, O), jnp.float32)
    p["beta"] = 0.1 * jax.random.normal(ks[8], (1, O), jnp.float32)
    p["w2"] = u(ks[9], (O, 1), 1.0 / (O ** 0.5))
    p["b2"] = u(ks[10], (1, 1), 0.1)
    # lane-dense fc2 tiling built ONCE here (not per call): the kernel's final
    # store becomes a full unmasked (8, 128) vreg write.
    p["w2_tiled"] = jnp.tile(p["w2"], (1, 128))
    p["b2_tiled"] = jnp.tile(p["b2"], (1, 128))
    return p


if __name__ == "__main__":
    # Small shapes consistent with the module: batch=2, channels=16,
    # hrsBack=7 -> seq=8, spatial stand-in T=64 (real sample_trim=23960),
    # num_features=32, LSTM hidden=rn1=16, out1=16.
    B = 2
    hrs_back = 7
    C, T, H = 16, 64, 16

    key = jax.random.PRNGKey(0)
    kx, kh, kc, kp = jax.random.split(key, 4)
    x = jax.random.normal(kx, (B, hrs_back + 1, C, T), jnp.float32)
    h0 = jax.random.normal(kh, (B, H), jnp.float32)   # torch.randn(1, B, rn1)
    c0 = jax.random.normal(kc, (B, H), jnp.float32)
    params = init_params(kp)

    out = medium_forward(x, h0, c0, params, hrs_back=hrs_back)
    out = jax.block_until_ready(out)
    assert out.shape == (B, 1), out.shape

    ref = reference_forward(x, h0, c0, params, hrs_back=hrs_back)
    err = float(jnp.max(jnp.abs(out - ref)))
    if not err < 1e-2:
        raise AssertionError(f"kernel/reference mismatch: max abs err = {err}")

    print("KERNEL_OK")
</pallas_src>

<mosaic_0001>
module attributes {stable_mosaic.version = 11 : i64} {
  func.func @_lstm_head_kernel(%arg0: memref<8x8x32xf32, #tpu.memory_space<vmem>>, %arg1: memref<8x16xf32, #tpu.memory_space<vmem>>, %arg2: memref<8x16xf32, #tpu.memory_space<vmem>>, %arg3: memref<32x64xf32, #tpu.memory_space<vmem>>, %arg4: memref<16x64xf32, #tpu.memory_space<vmem>>, %arg5: memref<1x64xf32, #tpu.memory_space<vmem>>, %arg6: memref<16x16xf32, #tpu.memory_space<vmem>>, %arg7: memref<1x16xf32, #tpu.memory_space<vmem>>, %arg8: memref<1x16xf32, #tpu.memory_space<vmem>>, %arg9: memref<1x16xf32, #tpu.memory_space<vmem>>, %arg10: memref<16x128xf32, #tpu.memory_space<vmem>>, %arg11: memref<1x128xf32, #tpu.memory_space<vmem>>, %arg12: memref<8x128xf32, #tpu.memory_space<vmem>>, %arg13: memref<8x8x16xf32, #tpu.memory_space<vmem>>) attributes {dimension_semantics = [], scalar_prefetch = 0 : i64, scratch_operands = 1 : i64, tpu.core_type = #tpu.core_type<tc>} {
    %c0 = arith.constant 0 : index
    %c0_0 = arith.constant 0 : index
    %0 = vector.load %arg4[%c0, %c0_0] : memref<16x64xf32, #tpu.memory_space<vmem>>, vector<16x64xf32>
    %1 = arith.truncf %0 : vector<16x64xf32> to vector<16x64xbf16>
    %c0_1 = arith.constant 0 : index
    %c0_2 = arith.constant 0 : index
    %c0_3 = arith.constant 0 : index
    %2 = vector.load %arg0[%c0_1, %c0_2, %c0_3] : memref<8x8x32xf32, #tpu.memory_space<vmem>>, vector<8x8x32xf32>
    %3 = vector.shape_cast %2 : vector<8x8x32xf32> to vector<64x32xf32>
    %4 = arith.truncf %3 : vector<64x32xf32> to vector<64x32xbf16>
    %c0_4 = arith.constant 0 : index
    %c0_5 = arith.constant 0 : index
    %5 = vector.load %arg3[%c0_4, %c0_5] : memref<32x64xf32, #tpu.memory_space<vmem>>, vector<32x64xf32>
    %6 = arith.truncf %5 : vector<32x64xf32> to vector<32x64xbf16>
    %cst = arith.constant dense<0.000000e+00> : vector<64x64xf32>
    %7 = tpu.matmul %4, %6, %cst {dimension_numbers = #tpu.dot_dimension_numbers<[1], [0], [0], [1], [0, 0, 1, 1], [], []>} : vector<64x32xbf16>, vector<32x64xbf16>, vector<64x64xf32> -> vector<64x64xf32>
    %c0_6 = arith.constant 0 : index
    %c0_7 = arith.constant 0 : index
    %8 = vector.load %arg5[%c0_6, %c0_7] : memref<1x64xf32, #tpu.memory_space<vmem>>, vector<1x64xf32>
    %9 = vector.broadcast %8 : vector<1x64xf32> to vector<64x64xf32>
    %10 = arith.addf %7, %9 : vector<64x64xf32>
    %c0_8 = arith.constant 0 : index
    %c0_9 = arith.constant 0 : index
    %11 = vector.load %arg1[%c0_8, %c0_9] : memref<8x16xf32, #tpu.memory_space<vmem>>, vector<8x16xf32>
    %c0_10 = arith.constant 0 : index
    %c0_11 = arith.constant 0 : index
    %12 = vector.load %arg2[%c0_10, %c0_11] : memref<8x16xf32, #tpu.memory_space<vmem>>, vector<8x16xf32>
    %13 = vector.extract_strided_slice %10 {offsets = [0, 0], sizes = [8, 64], strides = [1, 1]} : vector<64x64xf32> to vector<8x64xf32>
    %14 = arith.truncf %11 : vector<8x16xf32> to vector<8x16xbf16>
    %cst_12 = arith.constant dense<0.000000e+00> : vector<8x64xf32>
    %15 = tpu.matmul %14, %1, %cst_12 {dimension_numbers = #tpu.dot_dimension_numbers<[1], [0], [0], [1], [0, 0, 1, 1], [], []>} : vector<8x16xbf16>, vector<16x64xbf16>, vector<8x64xf32> -> vector<8x64xf32>
    %16 = arith.addf %13, %15 : vector<8x64xf32>
    %17 = vector.extract_strided_slice %16 {offsets = [0, 0], sizes = [8, 48], strides = [1, 1]} : vector<8x64xf32> to vector<8x48xf32>
    %18 = arith.negf %17 : vector<8x48xf32>
    %19 = math.exp %18 : vector<8x48xf32>
    %cst_13 = arith.constant 1.000000e+00 : f32
    %20 = vector.broadcast %cst_13 : f32 to vector<8x48xf32>
    %21 = arith.addf %20, %19 : vector<8x48xf32>
    %22 = arith.divf %20, %21 : vector<8x48xf32>
    %23 = vector.extract_strided_slice %16 {offsets = [0, 48], sizes = [8, 16], strides = [1, 1]} : vector<8x64xf32> to vector<8x16xf32>
    %24 = math.tanh %23 : vector<8x16xf32>
    %25 = vector.extract_strided_slice %22 {offsets = [0, 0], sizes = [8, 16], strides = [1, 1]} : vector<8x48xf32> to vector<8x16xf32>
    %26 = vector.extract_strided_slice %22 {offsets = [0, 16], sizes = [8, 16], strides = [1, 1]} : vector<8x48xf32> to vector<8x16xf32>
    %27 = vector.extract_strided_slice %22 {offsets = [0, 32], sizes = [8, 16], strides = [1, 1]} : vector<8x48xf32> to vector<8x16xf32>
    %28 = arith.mulf %26, %12 : vector<8x16xf32>
    %29 = arith.mulf %25, %24 : vector<8x16xf32>
    %30 = arith.addf %28, %29 : vector<8x16xf32>
    %31 = math.tanh %30 : vector<8x16xf32>
    %32 = arith.mulf %27, %31 : vector<8x16xf32>
    %c0_14 = arith.constant 0 : index
    %c0_15 = arith.constant 0 : index
    %c0_16 = arith.constant 0 : index
    %33 = vector.load %arg13[%c0_14, %c0_15, %c0_16] : memref<8x8x16xf32, #tpu.memory_space<vmem>>, vector<1x8x16xf32>
    %34 = vector.shape_cast %33 : vector<1x8x16xf32> to vector<8x16xf32>
    %35 = vector.shape_cast %32 : vector<8x16xf32> to vector<1x8x16xf32>
    tpu.vector_store %arg13[%c0_14, %c0_15, %c0_16], %35 {strides = array<i32>} : memref<8x8x16xf32, #tpu.memory_space<vmem>>, vector<1x8x16xf32>,
    %36 = vector.extract_strided_slice %10 {offsets = [8, 0], sizes = [8, 64], strides = [1, 1]} : vector<64x64xf32> to vector<8x64xf32>
    %37 = arith.truncf %32 : vector<8x16xf32> to vector<8x16xbf16>
    %cst_17 = arith.constant dense<0.000000e+00> : vector<8x64xf32>
    %38 = tpu.matmul %37, %1, %cst_17 {dimension_numbers = #tpu.dot_dimension_numbers<[1], [0], [0], [1], [0, 0, 1, 1], [], []>} : vector<8x16xbf16>, vector<16x64xbf16>, vector<8x64xf32> -> vector<8x64xf32>
    %39 = arith.addf %36, %38 : vector<8x64xf32>
    %40 = vector.extract_strided_slice %39 {offsets = [0, 0], sizes = [8, 48], strides = [1, 1]} : vector<8x64xf32> to vector<8x48xf32>
    %41 = arith.negf %40 : vector<8x48xf32>
    %42 = math.exp %41 : vector<8x48xf32>
    %cst_18 = arith.constant 1.000000e+00 : f32
    %43 = vector.broadcast %cst_18 : f32 to vector<8x48xf32>
    %44 = arith.addf %43, %42 : vector<8x48xf32>
    %45 = arith.divf %43, %44 : vector<8x48xf32>
    %46 = vector.extract_strided_slice %39 {offsets = [0, 48], sizes = [8, 16], strides = [1, 1]} : vector<8x64xf32> to vector<8x16xf32>
    %47 = math.tanh %46 : vector<8x16xf32>
    %48 = vector.extract_strided_slice %45 {offsets = [0, 0], sizes = [8, 16], strides = [1, 1]} : vector<8x48xf32> to vector<8x16xf32>
    %49 = vector.extract_strided_slice %45 {offsets = [0, 16], sizes = [8, 16], strides = [1, 1]} : vector<8x48xf32> to vector<8x16xf32>
    %50 = vector.extract_strided_slice %45 {offsets = [0, 32], sizes = [8, 16], strides = [1, 1]} : vector<8x48xf32> to vector<8x16xf32>
    %51 = arith.mulf %49, %30 : vector<8x16xf32>
    %52 = arith.mulf %48, %47 : vector<8x16xf32>
    %53 = arith.addf %51, %52 : vector<8x16xf32>
    %54 = math.tanh %53 : vector<8x16xf32>
    %55 = arith.mulf %50, %54 : vector<8x16xf32>
    %c1 = arith.constant 1 : index
    %c0_19 = arith.constant 0 : index
    %c0_20 = arith.constant 0 : index
    %56 = vector.load %arg13[%c1, %c0_19, %c0_20] : memref<8x8x16xf32, #tpu.memory_space<vmem>>, vector<1x8x16xf32>
    %57 = vector.shape_cast %56 : vector<1x8x16xf32> to vector<8x16xf32>
    %58 = vector.shape_cast %55 : vector<8x16xf32> to vector<1x8x16xf32>
    tpu.vector_store %arg13[%c1, %c0_19, %c0_20], %58 {strides = array<i32>} : memref<8x8x16xf32, #tpu.memory_space<vmem>>, vector<1x8x16xf32>,
    %59 = vector.extract_strided_slice %10 {offsets = [16, 0], sizes = [8, 64], strides = [1, 1]} : vector<64x64xf32> to vector<8x64xf32>
    %60 = arith.truncf %55 : vector<8x16xf32> to vector<8x16xbf16>
    %cst_21 = arith.constant dense<0.000000e+00> : vector<8x64xf32>
    %61 = tpu.matmul %60, %1, %cst_21 {dimension_numbers = #tpu.dot_dimension_numbers<[1], [0], [0], [1], [0, 0, 1, 1], [], []>} : vector<8x16xbf16>, vector<16x64xbf16>, vector<8x64xf32> -> vector<8x64xf32>
    %62 = arith.addf %59, %61 : vector<8x64xf32>
    %63 = vector.extract_strided_slice %62 {offsets = [0, 0], sizes = [8, 48], strides = [1, 1]} : vector<8x64xf32> to vector<8x48xf32>
    %64 = arith.negf %63 : vector<8x48xf32>
    %65 = math.exp %64 : vector<8x48xf32>
    %cst_22 = arith.constant 1.000000e+00 : f32
    %66 = vector.broadcast %cst_22 : f32 to vector<8x48xf32>
    %67 = arith.addf %66, %65 : vector<8x48xf32>
    %68 = arith.divf %66, %67 : vector<8x48xf32>
    %69 = vector.extract_strided_slice %62 {offsets = [0, 48], sizes = [8, 16], strides = [1, 1]} : vector<8x64xf32> to vector<8x16xf32>
    %70 = math.tanh %69 : vector<8x16xf32>
    %71 = vector.extract_strided_slice %68 {offsets = [0, 0], sizes = [8, 16], strides = [1, 1]} : vector<8x48xf32> to vector<8x16xf32>
    %72 = vector.extract_strided_slice %68 {offsets = [0, 16], sizes = [8, 16], strides = [1, 1]} : vector<8x48xf32> to vector<8x16xf32>
    %73 = vector.extract_strided_slice %68 {offsets = [0, 32], sizes = [8, 16], strides = [1, 1]} : vector<8x48xf32> to vector<8x16xf32>
    %74 = arith.mulf %72, %53 : vector<8x16xf32>
    %75 = arith.mulf %71, %70 : vector<8x16xf32>
    %76 = arith.addf %74, %75 : vector<8x16xf32>
    %77 = math.tanh %76 : vector<8x16xf32>
    %78 = arith.mulf %73, %77 : vector<8x16xf32>
    %c2 = arith.constant 2 : index
    %c0_23 = arith.constant 0 : index
    %c0_24 = arith.constant 0 : index
    %79 = vector.load %arg13[%c2, %c0_23, %c0_24] : memref<8x8x16xf32, #tpu.memory_space<vmem>>, vector<1x8x16xf32>
    %80 = vector.shape_cast %79 : vector<1x8x16xf32> to vector<8x16xf32>
    %81 = vector.shape_cast %78 : vector<8x16xf32> to vector<1x8x16xf32>
    tpu.vector_store %arg13[%c2, %c0_23, %c0_24], %81 {strides = array<i32>} : memref<8x8x16xf32, #tpu.memory_space<vmem>>, vector<1x8x16xf32>,
    %82 = vector.extract_strided_slice %10 {offsets = [24, 0], sizes = [8, 64], strides = [1, 1]} : vector<64x64xf32> to vector<8x64xf32>
    %83 = arith.truncf %78 : vector<8x16xf32> to vector<8x16xbf16>
    %cst_25 = arith.constant dense<0.000000e+00> : vector<8x64xf32>
    %84 = tpu.matmul %83, %1, %cst_25 {dimension_numbers = #tpu.dot_dimension_numbers<[1], [0], [0], [1], [0, 0, 1, 1], [], []>} : vector<8x16xbf16>, vector<16x64xbf16>, vector<8x64xf32> -> vector<8x64xf32>
    %85 = arith.addf %82, %84 : vector<8x64xf32>
    %86 = vector.extract_strided_slice %85 {offsets = [0, 0], sizes = [8, 48], strides = [1, 1]} : vector<8x64xf32> to vector<8x48xf32>
    %87 = arith.negf %86 : vector<8x48xf32>
    %88 = math.exp %87 : vector<8x48xf32>
    %cst_26 = arith.constant 1.000000e+00 : f32
    %89 = vector.broadcast %cst_26 : f32 to vector<8x48xf32>
    %90 = arith.addf %89, %88 : vector<8x48xf32>
    %91 = arith.divf %89, %90 : vector<8x48xf32>
    %92 = vector.extract_strided_slice %85 {offsets = [0, 48], sizes = [8, 16], strides = [1, 1]} : vector<8x64xf32> to vector<8x16xf32>
    %93 = math.tanh %92 : vector<8x16xf32>
    %94 = vector.extract_strided_slice %91 {offsets = [0, 0], sizes = [8, 16], strides = [1, 1]} : vector<8x48xf32> to vector<8x16xf32>
    %95 = vector.extract_strided_slice %91 {offsets = [0, 16], sizes = [8, 16], strides = [1, 1]} : vector<8x48xf32> to vector<8x16xf32>
    %96 = vector.extract_strided_slice %91 {offsets = [0, 32], sizes = [8, 16], strides = [1, 1]} : vector<8x48xf32> to vector<8x16xf32>
    %97 = arith.mulf %95, %76 : vector<8x16xf32>
    %98 = arith.mulf %94, %93 : vector<8x16xf32>
    %99 = arith.addf %97, %98 : vector<8x16xf32>
    %100 = math.tanh %99 : vector<8x16xf32>
    %101 = arith.mulf %96, %100 : vector<8x16xf32>
    %c3 = arith.constant 3 : index
    %c0_27 = arith.constant 0 : index
    %c0_28 = arith.constant 0 : index
    %102 = vector.load %arg13[%c3, %c0_27, %c0_28] : memref<8x8x16xf32, #tpu.memory_space<vmem>>, vector<1x8x16xf32>
    %103 = vector.shape_cast %102 : vector<1x8x16xf32> to vector<8x16xf32>
    %104 = vector.shape_cast %101 : vector<8x16xf32> to vector<1x8x16xf32>
    tpu.vector_store %arg13[%c3, %c0_27, %c0_28], %104 {strides = array<i32>} : memref<8x8x16xf32, #tpu.memory_space<vmem>>, vector<1x8x16xf32>,
    %105 = vector.extract_strided_slice %10 {offsets = [32, 0], sizes = [8, 64], strides = [1, 1]} : vector<64x64xf32> to vector<8x64xf32>
    %106 = arith.truncf %101 : vector<8x16xf32> to vector<8x16xbf16>
    %cst_29 = arith.constant dense<0.000000e+00> : vector<8x64xf32>
    %107 = tpu.matmul %106, %1, %cst_29 {dimension_numbers = #tpu.dot_dimension_numbers<[1], [0], [0], [1], [0, 0, 1, 1], [], []>} : vector<8x16xbf16>, vector<16x64xbf16>, vector<8x64xf32> -> vector<8x64xf32>
    %108 = arith.addf %105, %107 : vector<8x64xf32>
    %109 = vector.extract_strided_slice %108 {offsets = [0, 0], sizes = [8, 48], strides = [1, 1]} : vector<8x64xf32> to vector<8x48xf32>
    %110 = arith.negf %109 : vector<8x48xf32>
    %111 = math.exp %110 : vector<8x48xf32>
    %cst_30 = arith.constant 1.000000e+00 : f32
    %112 = vector.broadcast %cst_30 : f32 to vector<8x48xf32>
    %113 = arith.addf %112, %111 : vector<8x48xf32>
    %114 = arith.divf %112, %113 : vector<8x48xf32>
    %115 = vector.extract_strided_slice %108 {offsets = [0, 48], sizes = [8, 16], strides = [1, 1]} : vector<8x64xf32> to vector<8x16xf32>
    %116 = math.tanh %115 : vector<8x16xf32>
    %117 = vector.extract_strided_slice %114 {offsets = [0, 0], sizes = [8, 16], strides = [1, 1]} : vector<8x48xf32> to vector<8x16xf32>
    %118 = vector.extract_strided_slice %114 {offsets = [0, 16], sizes = [8, 16], strides = [1, 1]} : vector<8x48xf32> to vector<8x16xf32>
    %119 = vector.extract_strided_slice %114 {offsets = [0, 32], sizes = [8, 16], strides = [1, 1]} : vector<8x48xf32> to vector<8x16xf32>
    %120 = arith.mulf %118, %99 : vector<8x16xf32>
    %121 = arith.mulf %117, %116 : vector<8x16xf32>
    %122 = arith.addf %120, %121 : vector<8x16xf32>
    %123 = math.tanh %122 : vector<8x16xf32>
    %124 = arith.mulf %119, %123 : vector<8x16xf32>
    %c4 = arith.constant 4 : index
    %c0_31 = arith.constant 0 : index
    %c0_32 = arith.constant 0 : index
    %125 = vector.load %arg13[%c4, %c0_31, %c0_32] : memref<8x8x16xf32, #tpu.memory_space<vmem>>, vector<1x8x16xf32>
    %126 = vector.shape_cast %125 : vector<1x8x16xf32> to vector<8x16xf32>
    %127 = vector.shape_cast %124 : vector<8x16xf32> to vector<1x8x16xf32>
    tpu.vector_store %arg13[%c4, %c0_31, %c0_32], %127 {strides = array<i32>} : memref<8x8x16xf32, #tpu.memory_space<vmem>>, vector<1x8x16xf32>,
    %128 = vector.extract_strided_slice %10 {offsets = [40, 0], sizes = [8, 64], strides = [1, 1]} : vector<64x64xf32> to vector<8x64xf32>
    %129 = arith.truncf %124 : vector<8x16xf32> to vector<8x16xbf16>
    %cst_33 = arith.constant dense<0.000000e+00> : vector<8x64xf32>
    %130 = tpu.matmul %129, %1, %cst_33 {dimension_numbers = #tpu.dot_dimension_numbers<[1], [0], [0], [1], [0, 0, 1, 1], [], []>} : vector<8x16xbf16>, vector<16x64xbf16>, vector<8x64xf32> -> vector<8x64xf32>
    %131 = arith.addf %128, %130 : vector<8x64xf32>
    %132 = vector.extract_strided_slice %131 {offsets = [0, 0], sizes = [8, 48], strides = [1, 1]} : vector<8x64xf32> to vector<8x48xf32>
    %133 = arith.negf %132 : vector<8x48xf32>
    %134 = math.exp %133 : vector<8x48xf32>
    %cst_34 = arith.constant 1.000000e+00 : f32
    %135 = vector.broadcast %cst_34 : f32 to vector<8x48xf32>
    %136 = arith.addf %135, %134 : vector<8x48xf32>
    %137 = arith.divf %135, %136 : vector<8x48xf32>
    %138 = vector.extract_strided_slice %131 {offsets = [0, 48], sizes = [8, 16], strides = [1, 1]} : vector<8x64xf32> to vector<8x16xf32>
    %139 = math.tanh %138 : vector<8x16xf32>
    %140 = vector.extract_strided_slice %137 {offsets = [0, 0], sizes = [8, 16], strides = [1, 1]} : vector<8x48xf32> to vector<8x16xf32>
    %141 = vector.extract_strided_slice %137 {offsets = [0, 16], sizes = [8, 16], strides = [1, 1]} : vector<8x48xf32> to vector<8x16xf32>
    %142 = vector.extract_strided_slice %137 {offsets = [0, 32], sizes = [8, 16], strides = [1, 1]} : vector<8x48xf32> to vector<8x16xf32>
    %143 = arith.mulf %141, %122 : vector<8x16xf32>
    %144 = arith.mulf %140, %139 : vector<8x16xf32>
    %145 = arith.addf %143, %144 : vector<8x16xf32>
    %146 = math.tanh %145 : vector<8x16xf32>
    %147 = arith.mulf %142, %146 : vector<8x16xf32>
    %c5 = arith.constant 5 : index
    %c0_35 = arith.constant 0 : index
    %c0_36 = arith.constant 0 : index
    %148 = vector.load %arg13[%c5, %c0_35, %c0_36] : memref<8x8x16xf32, #tpu.memory_space<vmem>>, vector<1x8x16xf32>
    %149 = vector.shape_cast %148 : vector<1x8x16xf32> to vector<8x16xf32>
    %150 = vector.shape_cast %147 : vector<8x16xf32> to vector<1x8x16xf32>
    tpu.vector_store %arg13[%c5, %c0_35, %c0_36], %150 {strides = array<i32>} : memref<8x8x16xf32, #tpu.memory_space<vmem>>, vector<1x8x16xf32>,
    %151 = vector.extract_strided_slice %10 {offsets = [48, 0], sizes = [8, 64], strides = [1, 1]} : vector<64x64xf32> to vector<8x64xf32>
    %152 = arith.truncf %147 : vector<8x16xf32> to vector<8x16xbf16>
    %cst_37 = arith.constant dense<0.000000e+00> : vector<8x64xf32>
    %153 = tpu.matmul %152, %1, %cst_37 {dimension_numbers = #tpu.dot_dimension_numbers<[1], [0], [0], [1], [0, 0, 1, 1], [], []>} : vector<8x16xbf16>, vector<16x64xbf16>, vector<8x64xf32> -> vector<8x64xf32>
    %154 = arith.addf %151, %153 : vector<8x64xf32>
    %155 = vector.extract_strided_slice %154 {offsets = [0, 0], sizes = [8, 48], strides = [1, 1]} : vector<8x64xf32> to vector<8x48xf32>
    %156 = arith.negf %155 : vector<8x48xf32>
    %157 = math.exp %156 : vector<8x48xf32>
    %cst_38 = arith.constant 1.000000e+00 : f32
    %158 = vector.broadcast %cst_38 : f32 to vector<8x48xf32>
    %159 = arith.addf %158, %157 : vector<8x48xf32>
    %160 = arith.divf %158, %159 : vector<8x48xf32>
    %161 = vector.extract_strided_slice %154 {offsets = [0, 48], sizes = [8, 16], strides = [1, 1]} : vector<8x64xf32> to vector<8x16xf32>
    %162 = math.tanh %161 : vector<8x16xf32>
    %163 = vector.extract_strided_slice %160 {offsets = [0, 0], sizes = [8, 16], strides = [1, 1]} : vector<8x48xf32> to vector<8x16xf32>
    %164 = vector.extract_strided_slice %160 {offsets = [0, 16], sizes = [8, 16], strides = [1, 1]} : vector<8x48xf32> to vector<8x16xf32>
    %165 = vector.extract_strided_slice %160 {offsets = [0, 32], sizes = [8, 16], strides = [1, 1]} : vector<8x48xf32> to vector<8x16xf32>
    %166 = arith.mulf %164, %145 : vector<8x16xf32>
    %167 = arith.mulf %163, %162 : vector<8x16xf32>
    %168 = arith.addf %166, %167 : vector<8x16xf32>
    %169 = math.tanh %168 : vector<8x16xf32>
    %170 = arith.mulf %165, %169 : vector<8x16xf32>
    %c6 = arith.constant 6 : index
    %c0_39 = arith.constant 0 : index
    %c0_40 = arith.constant 0 : index
    %171 = vector.load %arg13[%c6, %c0_39, %c0_40] : memref<8x8x16xf32, #tpu.memory_space<vmem>>, vector<1x8x16xf32>
    %172 = vector.shape_cast %171 : vector<1x8x16xf32> to vector<8x16xf32>
    %173 = vector.shape_cast %170 : vector<8x16xf32> to vector<1x8x16xf32>
    tpu.vector_store %arg13[%c6, %c0_39, %c0_40], %173 {strides = array<i32>} : memref<8x8x16xf32, #tpu.memory_space<vmem>>, vector<1x8x16xf32>,
    %174 = vector.extract_strided_slice %10 {offsets = [56, 0], sizes = [8, 64], strides = [1, 1]} : vector<64x64xf32> to vector<8x64xf32>
    %175 = arith.truncf %170 : vector<8x16xf32> to vector<8x16xbf16>
    %cst_41 = arith.constant dense<0.000000e+00> : vector<8x64xf32>
    %176 = tpu.matmul %175, %1, %cst_41 {dimension_numbers = #tpu.dot_dimension_numbers<[1], [0], [0], [1], [0, 0, 1, 1], [], []>} : vector<8x16xbf16>, vector<16x64xbf16>, vector<8x64xf32> -> vector<8x64xf32>
    %177 = arith.addf %174, %176 : vector<8x64xf32>
    %178 = vector.extract_strided_slice %177 {offsets = [0, 0], sizes = [8, 48], strides = [1, 1]} : vector<8x64xf32> to vector<8x48xf32>
    %179 = arith.negf %178 : vector<8x48xf32>
    %180 = math.exp %179 : vector<8x48xf32>
    %cst_42 = arith.constant 1.000000e+00 : f32
    %181 = vector.broadcast %cst_42 : f32 to vector<8x48xf32>
    %182 = arith.addf %181, %180 : vector<8x48xf32>
    %183 = arith.divf %181, %182 : vector<8x48xf32>
    %184 = vector.extract_strided_slice %177 {offsets = [0, 48], sizes = [8, 16], strides = [1, 1]} : vector<8x64xf32> to vector<8x16xf32>
    %185 = math.tanh %184 : vector<8x16xf32>
    %186 = vector.extract_strided_slice %183 {offsets = [0, 0], sizes = [8, 16], strides = [1, 1]} : vector<8x48xf32> to vector<8x16xf32>
    %187 = vector.extract_strided_slice %183 {offsets = [0, 16], sizes = [8, 16], strides = [1, 1]} : vector<8x48xf32> to vector<8x16xf32>
    %188 = vector.extract_strided_slice %183 {offsets = [0, 32], sizes = [8, 16], strides = [1, 1]} : vector<8x48xf32> to vector<8x16xf32>
    %189 = arith.mulf %187, %168 : vector<8x16xf32>
    %190 = arith.mulf %186, %185 : vector<8x16xf32>
    %191 = arith.addf %189, %190 : vector<8x16xf32>
    %192 = math.tanh %191 : vector<8x16xf32>
    %193 = arith.mulf %188, %192 : vector<8x16xf32>
    %c7 = arith.constant 7 : index
    %c0_43 = arith.constant 0 : index
    %c0_44 = arith.constant 0 : index
    %194 = vector.load %arg13[%c7, %c0_43, %c0_44] : memref<8x8x16xf32, #tpu.memory_space<vmem>>, vector<1x8x16xf32>
    %195 = vector.shape_cast %194 : vector<1x8x16xf32> to vector<8x16xf32>
    %196 = vector.shape_cast %193 : vector<8x16xf32> to vector<1x8x16xf32>
    tpu.vector_store %arg13[%c7, %c0_43, %c0_44], %196 {strides = array<i32>} : memref<8x8x16xf32, #tpu.memory_space<vmem>>, vector<1x8x16xf32>,
    %c0_45 = arith.constant 0 : index
    %c0_46 = arith.constant 0 : index
    %197 = vector.load %arg6[%c0_45, %c0_46] : memref<16x16xf32, #tpu.memory_space<vmem>>, vector<16x16xf32>
    %198 = arith.truncf %197 : vector<16x16xf32> to vector<16x16xbf16>
    %c0_47 = arith.constant 0 : index
    %c0_48 = arith.constant 0 : index
    %c0_49 = arith.constant 0 : index
    %199 = vector.load %arg13[%c0_47, %c0_48, %c0_49] : memref<8x8x16xf32, #tpu.memory_space<vmem>>, vector<8x8x16xf32>
    %200 = vector.shape_cast %199 : vector<8x8x16xf32> to vector<64x16xf32>
    %201 = arith.truncf %200 : vector<64x16xf32> to vector<64x16xbf16>
    %cst_50 = arith.constant dense<0.000000e+00> : vector<64x16xf32>
    %202 = tpu.matmul %201, %198, %cst_50 {dimension_numbers = #tpu.dot_dimension_numbers<[1], [0], [0], [1], [0, 0, 1, 1], [], []>} : vector<64x16xbf16>, vector<16x16xbf16>, vector<64x16xf32> -> vector<64x16xf32>
    %c0_51 = arith.constant 0 : index
    %c0_52 = arith.constant 0 : index
    %203 = vector.load %arg7[%c0_51, %c0_52] : memref<1x16xf32, #tpu.memory_space<vmem>>, vector<1x16xf32>
    %204 = vector.broadcast %203 : vector<1x16xf32> to vector<64x16xf32>
    %205 = arith.addf %202, %204 : vector<64x16xf32>
    %cst_53 = arith.constant 0.000000e+00 : f32
    %206 = vector.broadcast %cst_53 : f32 to vector<64x16xf32>
    %207 = arith.maximumf %205, %206 : vector<64x16xf32>
    %208 = tpu.iota {dimensions = array<i32: 0>} : vector<64x1xi32>
    %c7_i32 = arith.constant 7 : i32
    %209 = vector.broadcast %c7_i32 : i32 to vector<64x1xi32>
    %210 = arith.andi %208, %209 : vector<64x1xi32>
    %c2_i32 = arith.constant 2 : i32
    %211 = vector.broadcast %c2_i32 : i32 to vector<64x1xi32>
    %212 = arith.cmpi slt, %210, %211 : vector<64x1xi32>
    %213 = arith.extui %212 : vector<64x1xi1> to vector<64x1xi32>
    %214 = arith.sitofp %213 : vector<64x1xi32> to vector<64x1xf32>
    %215 = vector.broadcast %214 : vector<64x1xf32> to vector<64x16xf32>
    %216 = arith.mulf %207, %215 : vector<64x16xf32>
    %cst_54 = arith.constant dense<0.000000e+00> : vector<16xf32>
    %217 = vector.multi_reduction <add>, %216, %cst_54 [0] : vector<64x16xf32> to vector<16xf32>
    %218 = vector.shape_cast %217 : vector<16xf32> to vector<1x16xf32>
    %cst_55 = arith.constant 6.250000e-02 : f32
    %219 = vector.broadcast %cst_55 : f32 to vector<1x16xf32>
    %220 = arith.mulf %218, %219 : vector<1x16xf32>
    %221 = arith.mulf %216, %216 : vector<64x16xf32>
    %cst_56 = arith.constant dense<0.000000e+00> : vector<16xf32>
    %222 = vector.multi_reduction <add>, %221, %cst_56 [0] : vector<64x16xf32> to vector<16xf32>
    %223 = vector.shape_cast %222 : vector<16xf32> to vector<1x16xf32>
    %cst_57 = arith.constant 6.250000e-02 : f32
    %224 = vector.broadcast %cst_57 : f32 to vector<1x16xf32>
    %225 = arith.mulf %223, %224 : vector<1x16xf32>
    %226 = arith.mulf %220, %220 : vector<1x16xf32>
    %227 = arith.subf %225, %226 : vector<1x16xf32>
    %cst_58 = arith.constant 0.000000e+00 : f32
    %228 = vector.broadcast %cst_58 : f32 to vector<1x16xf32>
    %229 = arith.maximumf %227, %228 : vector<1x16xf32>
    %230 = vector.extract_strided_slice %207 {offsets = [56, 0], sizes = [8, 16], strides = [1, 1]} : vector<64x16xf32> to vector<8x16xf32>
    %231 = vector.broadcast %220 : vector<1x16xf32> to vector<8x16xf32>
    %232 = arith.subf %230, %231 : vector<8x16xf32>
    %cst_59 = arith.constant 9.99999974E-6 : f32
    %233 = vector.broadcast %cst_59 : f32 to vector<1x16xf32>
    %234 = arith.addf %229, %233 : vector<1x16xf32>
    %235 = math.rsqrt %234 : vector<1x16xf32>
    %236 = vector.broadcast %235 : vector<1x16xf32> to vector<8x16xf32>
    %237 = arith.mulf %232, %236 : vector<8x16xf32>
    %c0_60 = arith.constant 0 : index
    %c0_61 = arith.constant 0 : index
    %238 = vector.load %arg8[%c0_60, %c0_61] : memref<1x16xf32, #tpu.memory_space<vmem>>, vector<1x16xf32>
    %239 = vector.broadcast %238 : vector<1x16xf32> to vector<8x16xf32>
    %240 = arith.mulf %237, %239 : vector<8x16xf32>
    %c0_62 = arith.constant 0 : index
    %c0_63 = arith.constant 0 : index
    %241 = vector.load %arg9[%c0_62, %c0_63] : memref<1x16xf32, #tpu.memory_space<vmem>>, vector<1x16xf32>
    %242 = vector.broadcast %241 : vector<1x16xf32> to vector<8x16xf32>
    %243 = arith.addf %240, %242 : vector<8x16xf32>
    %244 = arith.truncf %243 : vector<8x16xf32> to vector<8x16xbf16>
    %c0_64 = arith.constant 0 : index
    %c0_65 = arith.constant 0 : index
    %245 = vector.load %arg10[%c0_64, %c0_65] : memref<16x128xf32, #tpu.memory_space<vmem>>, vector<16x128xf32>
    %246 = arith.truncf %245 : vector<16x128xf32> to vector<16x128xbf16>
    %cst_66 = arith.constant dense<0.000000e+00> : vector<8x128xf32>
    %247 = tpu.matmul %244, %246, %cst_66 {dimension_numbers = #tpu.dot_dimension_numbers<[1], [0], [0], [1], [0, 0, 1, 1], [], []>} : vector<8x16xbf16>, vector<16x128xbf16>, vector<8x128xf32> -> vector<8x128xf32>
    %c0_67 = arith.constant 0 : index
    %c0_68 = arith.constant 0 : index
    %248 = vector.load %arg11[%c0_67, %c0_68] : memref<1x128xf32, #tpu.memory_space<vmem>>, vector<1x128xf32>
    %249 = vector.broadcast %248 : vector<1x128xf32> to vector<8x128xf32>
    %250 = arith.addf %247, %249 : vector<8x128xf32>
    %251 = arith.negf %250 : vector<8x128xf32>
    %252 = math.exp %251 : vector<8x128xf32>
    %cst_69 = arith.constant 1.000000e+00 : f32
    %253 = vector.broadcast %cst_69 : f32 to vector<8x128xf32>
    %254 = arith.addf %253, %252 : vector<8x128xf32>
    %255 = arith.divf %253, %254 : vector<8x128xf32>
    %c0_70 = arith.constant 0 : index
    %c0_71 = arith.constant 0 : index
    %256 = vector.load %arg12[%c0_70, %c0_71] : memref<8x128xf32, #tpu.memory_space<vmem>>, vector<8x128xf32>
    tpu.vector_store %arg12[%c0_70, %c0_71], %255 {strides = array<i32>} : memref<8x128xf32, #tpu.memory_space<vmem>>, vector<8x128xf32>,
    return
  }
}

</mosaic_0001>

<llo_original>
// kernel: tpu_custom_call.1
$region0: #{tpu_custom_call.1}
  #allocation0 [shape = 'u32[]', space=smem, size = 0x4, offset = 0x4, fixed_abs, tag = 'smem constant byte address 0x4 - core index']
  #allocation1 [shape = 'u32[144,128]{1,0:T(1,128)}', space=vmem, size = 0x12000, scoped, tag = 'internal scratch']
  #allocation2 [shape = 'f32[8,8,16]{2,1,0:T(8,128)}', space=vmem, size = 0x8000, scoped, tag = 'scratch operand']
  %s0 = inlined_call_operand.hbm [shape: f32[8,8,32], index: 0, kind: input, shape index: {}]
  %s1 = inlined_call_operand.hbm [shape: f32[8,16], index: 1, kind: input, shape index: {}]
  %s2 = inlined_call_operand.hbm [shape: f32[8,16], index: 2, kind: input, shape index: {}]
  %s3 = inlined_call_operand.hbm [shape: f32[32,64], index: 3, kind: input, shape index: {}]
  %s4 = inlined_call_operand.hbm [shape: f32[16,64], index: 4, kind: input, shape index: {}]
  %s5 = inlined_call_operand.vmem [shape: f32[1,64], index: 5, kind: input, shape index: {}]
  %s6 = inlined_call_operand.hbm [shape: f32[16,16], index: 6, kind: input, shape index: {}]
  %s7 = inlined_call_operand.vmem [shape: f32[1,16], index: 7, kind: input, shape index: {}]
  %s8 = inlined_call_operand.hbm [shape: f32[1,16], index: 8, kind: input, shape index: {}]
  %s9 = inlined_call_operand.hbm [shape: f32[1,16], index: 9, kind: input, shape index: {}]
  %s10 = inlined_call_operand.vmem [shape: f32[16,128], index: 10, kind: input, shape index: {}]
  %s11 = inlined_call_operand.vmem [shape: f32[1,128], index: 11, kind: input, shape index: {}]
  %s12 = inlined_call_operand.hbm [shape: f32[8,128], index: 12, kind: output, shape index: {}]
  %s13 = sld [smem:[#allocation0]]
  $region90: #{tpu_custom_call.1} parent=0
    _
  %s15 = ssub.s32 1, %s13
  %s16 = scalar_select 0, %s15, %s13
  $region1: #{tpu_custom_call.1} parent=0
    #allocation3 [shape = 'u8[32768]{0}', space=vmem, size = 0x8000, scoped, tag = 'input window, operand 0, single buffered']
    #allocation4 [shape = 's32[1]{0}', space=sflag, size = 0x4, scoped, tag = 'scoped memory for tpu_custom_call.1']
    #allocation5 [shape = 's32[1]{0}', space=sflag, size = 0x4, scoped, tag = 'scoped memory for tpu_custom_call.1']
    #allocation6 [shape = 'u8[4096]{0}', space=vmem, size = 0x1000, scoped, tag = 'input window, operand 1, single buffered']
    #allocation7 [shape = 's32[1]{0}', space=sflag, size = 0x4, scoped, tag = 'scoped memory for tpu_custom_call.1']
    #allocation8 [shape = 'u8[4096]{0}', space=vmem, size = 0x1000, scoped, tag = 'input window, operand 2, single buffered']
    #allocation9 [shape = 'u8[16384]{0}', space=vmem, size = 0x4000, scoped, tag = 'input window, operand 3, single buffered']
    #allocation10 [shape = 's32[1]{0}', space=sflag, size = 0x4, scoped, tag = 'scoped memory for tpu_custom_call.1']
    #allocation11 [shape = 'u8[8192]{0}', space=vmem, size = 0x2000, scoped, tag = 'input window, operand 4, single buffered']
    #allocation12 [shape = 'u8[8192]{0}', space=vmem, size = 0x2000, scoped, tag = 'input window, operand 6, single buffered']
    #allocation13 [shape = 's32[1]{0}', space=sflag, size = 0x4, scoped, tag = 'scoped memory for tpu_custom_call.1']
    #allocation14 [shape = 'u8[512]{0}', space=vmem, size = 0x400, scoped, tag = 'input window, operand 8, single buffered']
    #allocation15 [shape = 'u8[512]{0}', space=vmem, size = 0x400, scoped, tag = 'input window, operand 9, single buffered']
    #allocation16 [shape = 's32[1]{0}', space=sflag, size = 0x4, scoped, tag = 'scoped memory for tpu_custom_call.1']
    #allocation17 [shape = 'u8[4096]{0}', space=vmem, size = 0x1000, scoped, tag = 'output window, operand 0, single buffered']
    %17 = vsyncpa [#allocation4], 0
    %18 = vsyncpa [#allocation7], 0
    %19 = vsyncpa [#allocation10], 0
    %20 = vsyncpa [#allocation13], 0
    %21 = vsyncpa [#allocation16], 0
    %22 = vsyncpa [#allocation5], 0
    // Predicated region
    $region2: #{tpu_custom_call.1} parent=1 // pred_check
      _
    $region3: #{tpu_custom_call.1} parent=1 // pred_check_branch
      %24 = sbr.rel (0) target = $region5
    $region4: #{tpu_custom_call.1} parent=1 // pred_region
      %s26 = ssub.s32 1024, 1024
      %27 = vsyncadd [#allocation4], %s26
      %s28 = sshll.u32 [#allocation3], 4
      %s29 = int_to_ptr.vmem [resolvable:$true] %s28
      %34 = dma.hbm_to_vmem [thread:$0]  %s0, 1024, %s29, [#allocation4], 128, 128, 8
    $region5: #{tpu_custom_call.1} parent=1 // pred_fallthru
      _
    // Predicated region
    $region6: #{tpu_custom_call.1} parent=1 // pred_check
      _
    $region7: #{tpu_custom_call.1} parent=1 // pred_check_branch
      %36 = sbr.rel (0) target = $region9
    $region8: #{tpu_custom_call.1} parent=1 // pred_region
      %s38 = ssub.s32 128, 128
      %39 = vsyncadd [#allocation7], %s38
      %s41 = sshll.u32 [#allocation6], 4
      %s42 = int_to_ptr.vmem [resolvable:$true] %s41
      %44 = dma.hbm_to_vmem [thread:$0]  %s1, 128, %s42, [#allocation7]
    $region9: #{tpu_custom_call.1} parent=1 // pred_fallthru
      _
    // Predicated region
    $region10: #{tpu_custom_call.1} parent=1 // pred_check
      _
    $region11: #{tpu_custom_call.1} parent=1 // pred_check_branch
      %46 = sbr.rel (0) target = $region13
    $region12: #{tpu_custom_call.1} parent=1 // pred_region
      %s48 = ssub.s32 128, 128
      %49 = vsyncadd [#allocation7], %s48
      %s51 = sshll.u32 [#allocation8], 4
      %s52 = int_to_ptr.vmem [resolvable:$true] %s51
      %54 = dma.hbm_to_vmem [thread:$0]  %s2, 128, %s52, [#allocation7]
    $region13: #{tpu_custom_call.1} parent=1 // pred_fallthru
      _
    // Predicated region
    $region14: #{tpu_custom_call.1} parent=1 // pred_check
      _
    $region15: #{tpu_custom_call.1} parent=1 // pred_check_branch
      %56 = sbr.rel (0) target = $region17
    $region16: #{tpu_custom_call.1} parent=1 // pred_region
      %s58 = ssub.s32 512, 512
      %59 = vsyncadd [#allocation10], %s58
      %s60 = sshll.u32 [#allocation9], 4
      %s61 = int_to_ptr.vmem [resolvable:$true] %s60
      %66 = dma.hbm_to_vmem [thread:$0]  %s3, 512, %s61, [#allocation10], 128, 128, 8
    $region17: #{tpu_custom_call.1} parent=1 // pred_fallthru
      _
    // Predicated region
    $region18: #{tpu_custom_call.1} parent=1 // pred_check
      _
    $region19: #{tpu_custom_call.1} parent=1 // pred_check_branch
      %68 = sbr.rel (0) target = $region21
    $region20: #{tpu_custom_call.1} parent=1 // pred_region
      %s70 = ssub.s32 256, 256
      %71 = vsyncadd [#allocation10], %s70
      %s72 = sshll.u32 [#allocation11], 4
      %s73 = int_to_ptr.vmem [resolvable:$true] %s72
      %78 = dma.hbm_to_vmem [thread:$0]  %s4, 256, %s73, [#allocation10], 128, 128, 8
    $region21: #{tpu_custom_call.1} parent=1 // pred_fallthru
      _
    // Predicated region
    $region22: #{tpu_custom_call.1} parent=1 // pred_check
      _
    $region23: #{tpu_custom_call.1} parent=1 // pred_check_branch
      %80 = sbr.rel (0) target = $region25
    $region24: #{tpu_custom_call.1} parent=1 // pred_region
      _
    $region25: #{tpu_custom_call.1} parent=1 // pred_fallthru
      _
    // Predicated region
    $region26: #{tpu_custom_call.1} parent=1 // pred_check
      _
    $region27: #{tpu_custom_call.1} parent=1 // pred_check_branch
      %82 = sbr.rel (0) target = $region29
    $region28: #{tpu_custom_call.1} parent=1 // pred_region
      %s84 = ssub.s32 256, 256
      %85 = vsyncadd [#allocation13], %s84
      %s86 = sshll.u32 [#allocation12], 4
      %s87 = int_to_ptr.vmem [resolvable:$true] %s86
      %92 = dma.hbm_to_vmem [thread:$0]  %s6, 256, %s87, [#allocation13], 128, 128, 8
    $region29: #{tpu_custom_call.1} parent=1 // pred_fallthru
      _
    // Predicated region
    $region30: #{tpu_custom_call.1} parent=1 // pred_check
      _
    $region31: #{tpu_custom_call.1} parent=1 // pred_check_branch
      %94 = sbr.rel (0) target = $region33
    $region32: #{tpu_custom_call.1} parent=1 // pred_region
      _
    $region33: #{tpu_custom_call.1} parent=1 // pred_fallthru
      _
    // Predicated region
    $region34: #{tpu_custom_call.1} parent=1 // pred_check
      _
    $region35: #{tpu_custom_call.1} parent=1 // pred_check_branch
      %96 = sbr.rel (0) target = $region37
    $region36: #{tpu_custom_call.1} parent=1 // pred_region
      %s98 = ssub.s32 16, 16
      %99 = vsyncadd [#allocation13], %s98
      %s101 = sshll.u32 [#allocation14], 4
      %s102 = int_to_ptr.vmem [resolvable:$true] %s101
      %104 = dma.hbm_to_vmem [thread:$0]  %s8, 16, %s102, [#allocation13]
    $region37: #{tpu_custom_call.1} parent=1 // pred_fallthru
      _
    // Predicated region
    $region38: #{tpu_custom_call.1} parent=1 // pred_check
      _
    $region39: #{tpu_custom_call.1} parent=1 // pred_check_branch
      %106 = sbr.rel (0) target = $region41
    $region40: #{tpu_custom_call.1} parent=1 // pred_region
      %s108 = ssub.s32 16, 16
      %109 = vsyncadd [#allocation16], %s108
      %s111 = sshll.u32 [#allocation15], 4
      %s112 = int_to_ptr.vmem [resolvable:$true] %s111
      %114 = dma.hbm_to_vmem [thread:$0]  %s9, 16, %s112, [#allocation16]
    $region41: #{tpu_custom_call.1} parent=1 // pred_fallthru
      _
    // Predicated region
    $region42: #{tpu_custom_call.1} parent=1 // pred_check
      _
    $region43: #{tpu_custom_call.1} parent=1 // pred_check_branch
      %116 = sbr.rel (0) target = $region45
    $region44: #{tpu_custom_call.1} parent=1 // pred_region
      _
    $region45: #{tpu_custom_call.1} parent=1 // pred_fallthru
      _
    // Predicated region
    $region46: #{tpu_custom_call.1} parent=1 // pred_check
      _
    $region47: #{tpu_custom_call.1} parent=1 // pred_check_branch
      %118 = sbr.rel (0) target = $region49
    $region48: #{tpu_custom_call.1} parent=1 // pred_region
      _
    $region49: #{tpu_custom_call.1} parent=1 // pred_fallthru
      _
    // Predicated region
    $region50: #{tpu_custom_call.1} parent=1 // pred_check
      _
    $region51: #{tpu_custom_call.1} parent=1 // pred_check_branch
      %120 = sbr.rel (0) target = $region53
    $region52: #{tpu_custom_call.1} parent=1 // pred_region
      %121 = dma.done [#allocation4], 1024
    $region53: #{tpu_custom_call.1} parent=1 // pred_fallthru
      _
    // Predicated region
    $region54: #{tpu_custom_call.1} parent=1 // pred_check
      _
    $region55: #{tpu_custom_call.1} parent=1 // pred_check_branch
      %123 = sbr.rel (0) target = $region57
    $region56: #{tpu_custom_call.1} parent=1 // pred_region
      %124 = dma.done [#allocation7], 128
    $region57: #{tpu_custom_call.1} parent=1 // pred_fallthru
      _
    // Predicated region
    $region58: #{tpu_custom_call.1} parent=1 // pred_check
      _
    $region59: #{tpu_custom_call.1} parent=1 // pred_check_branch
      %126 = sbr.rel (0) target = $region61
    $region60: #{tpu_custom_call.1} parent=1 // pred_region
      %127 = dma.done [#allocation7], 128
    $region61: #{tpu_custom_call.1} parent=1 // pred_fallthru
      _
    // Predicated region
    $region62: #{tpu_custom_call.1} parent=1 // pred_check
      _
    $region63: #{tpu_custom_call.1} parent=1 // pred_check_branch
      %129 = sbr.rel (0) target = $region65
    $region64: #{tpu_custom_call.1} parent=1 // pred_region
      %130 = dma.done [#allocation10], 512
    $region65: #{tpu_custom_call.1} parent=1 // pred_fallthru
      _
    // Predicated region
    $region66: #{tpu_custom_call.1} parent=1 // pred_check
      _
    $region67: #{tpu_custom_call.1} parent=1 // pred_check_branch
      %132 = sbr.rel (0) target = $region69
    $region68: #{tpu_custom_call.1} parent=1 // pred_region
      %133 = dma.done [#allocation10], 256
    $region69: #{tpu_custom_call.1} parent=1 // pred_fallthru
      _
    // Predicated region
    $region70: #{tpu_custom_call.1} parent=1 // pred_check
      _
    $region71: #{tpu_custom_call.1} parent=1 // pred_check_branch
      %135 = sbr.rel (0) target = $region73
    $region72: #{tpu_custom_call.1} parent=1 // pred_region
      %136 = dma.done [#allocation13], 256
    $region73: #{tpu_custom_call.1} parent=1 // pred_fallthru
      _
    // Predicated region
    $region74: #{tpu_custom_call.1} parent=1 // pred_check
      _
    $region75: #{tpu_custom_call.1} parent=1 // pred_check_branch
      %138 = sbr.rel (0) target = $region77
    $region76: #{tpu_custom_call.1} parent=1 // pred_region
      %139 = dma.done [#allocation13], 16
    $region77: #{tpu_custom_call.1} parent=1 // pred_fallthru
      _
    // Predicated region
    $region78: #{tpu_custom_call.1} parent=1 // pred_check
      _
    $region79: #{tpu_custom_call.1} parent=1 // pred_check_branch
      %141 = sbr.rel (0) target = $region81
    $region80: #{tpu_custom_call.1} parent=1 // pred_region
      %142 = dma.done [#allocation16], 16
    $region81: #{tpu_custom_call.1} parent=1 // pred_fallthru
      _
    %v144 = vld [vmem:[#allocation11] sm:$0xff]
    %v145 = vld [vmem:[#allocation11 + $0x8] sm:$0xff]
    %v146 = vpack.c.bf16 %v145, %v144
    %v147 = vld [vmem:[#allocation3] sm:$0xff]
    %v148 = vld [vmem:[#allocation3 + $0x8] sm:$0xff]
    %v149 = vld [vmem:[#allocation3 + $0x10] sm:$0xff]
    %v150 = vld [vmem:[#allocation3 + $0x18] sm:$0xff]
    %v151 = vld [vmem:[#allocation3 + $0x20] sm:$0xff]
    %v152 = vld [vmem:[#allocation3 + $0x28] sm:$0xff]
    %v153 = vld [vmem:[#allocation3 + $0x30] sm:$0xff]
    %v154 = vld [vmem:[#allocation3 + $0x38] sm:$0xff]
    %v155 = vpack.c.bf16 %v148, %v147
    %v156 = vpack.c.bf16 %v150, %v149
    %v157 = vpack.c.bf16 %v152, %v151
    %v158 = vpack.c.bf16 %v154, %v153
    %v159 = vld [vmem:[#allocation9] sm:$0xff]
    %v160 = vld [vmem:[#allocation9 + $0x8] sm:$0xff]
    %v161 = vld [vmem:[#allocation9 + $0x10] sm:$0xff]
    %v162 = vld [vmem:[#allocation9 + $0x18] sm:$0xff]
    %v163 = vpack.c.bf16 %v160, %v159
    %v164 = vpack.c.bf16 %v162, %v161
    %v165 = vld [vmem:[%s5] sm:$0x1]
    %v167 = vlaneseq
    %v168 = vshrl.u32 %v167, 7
    %v169 = vsub.s32 0, %v168
    %v170 = vrot.slane %v165, %v169
    %vm172 = vcmask 261120
    %v174 = vsel %vm172, %v155, 0
    %v177 = vsel %vm172, %v156, 0
    %v180 = vsel %vm172, %v157, 0
    %v183 = vsel %vm172, %v158, 0
    %185 = vmatprep.subr.bf16.mxu0 0
    %186 = vmatpush1.bf16.msra.mxu0 0
    %187 = vmatprep.subr.bf16.mxu0 0
    %188 = vmatpush1.bf16.msra.mxu0 0
    %189 = vmatprep.subr.bf16.mxu0 0
    %190 = vmatpush1.bf16.msra.mxu0 0
    %191 = vmatprep.subr.bf16.mxu0 0
    %192 = vmatpush1.bf16.msra.mxu0 0
    %193 = vmatprep.subr.bf16.mxu0 0
    %194 = vmatpush1.bf16.msra.mxu0 0
    %195 = vmatprep.subr.bf16.mxu0 0
    %196 = vmatpush1.bf16.msra.mxu0 0
    %197 = vmatprep.subr.bf16.mxu0 0
    %198 = vmatpush1.bf16.msra.mxu0 %v164
    %199 = vmatprep.subr.bf16.mxu0 0
    %200 = vmatpush1.bf16.msra.mxu0 %v163
    %201 = vmatprep.subr.bf16.mxu0 0
    %202 = vmatpush2.bf16.msra.mxu0 0
    %203 = vmatprep.subr.bf16.mxu0 0
    %204 = vmatpush2.bf16.msra.mxu0 0
    %205 = vmatprep.subr.bf16.mxu0 0
    %206 = vmatpush2.bf16.msra.mxu0 0
    %207 = vmatprep.subr.bf16.mxu0 0
    %208 = vmatpush2.bf16.msra.mxu0 0
    %209 = vmatprep.subr.bf16.mxu0 0
    %210 = vmatpush2.bf16.msra.mxu0 0
    %211 = vmatprep.subr.bf16.mxu0 0
    %212 = vmatpush2.bf16.msra.mxu0 0
    %213 = vmatprep.subr.bf16.mxu0 0
    %214 = vmatpush2.bf16.msra.mxu0 0
    %215 = vmatprep.subr.bf16.mxu0 0
    %216 = vmatpush2.bf16.msra.mxu0 0
    %217 = vmatprep.mubr.bf16.mxu0 0
    %218 = vmatmul.mubr.bf16.gmra.mxu0 %v174
    %v219 = vpop.f32.mrf.mxu0
    %v220 = vadd.f32 %v170, %v219
    %v221 = vpop.f32.mrf.mxu0
    %v222 = vpop.f32.mrf.mxu0
    %v223 = vadd.f32 %v170, %v222
    %v224 = vpop.f32.mrf.mxu0
    %225 = vmatprep.mubr.bf16.mxu0 0
    %226 = vmatmul.mubr.bf16.gmra.mxu0 %v177
    %v227 = vpop.f32.mrf.mxu0
    %v228 = vadd.f32 %v170, %v227
    %v229 = vpop.f32.mrf.mxu0
    %v230 = vpop.f32.mrf.mxu0
    %v231 = vadd.f32 %v170, %v230
    %v232 = vpop.f32.mrf.mxu0
    %233 = vmatprep.mubr.bf16.mxu0 0
    %234 = vmatmul.mubr.bf16.gmra.mxu0 %v180
    %v235 = vpop.f32.mrf.mxu0
    %v236 = vadd.f32 %v170, %v235
    %v237 = vpop.f32.mrf.mxu0
    %v238 = vpop.f32.mrf.mxu0
    %v239 = vadd.f32 %v170, %v238
    %v240 = vpop.f32.mrf.mxu0
    %241 = vmatprep.mubr.bf16.mxu0 0
    %242 = vmatmul.mubr.bf16.gmra.mxu0 %v183
    %v243 = vpop.f32.mrf.mxu0
    %v244 = vadd.f32 %v170, %v243
    %v245 = vpop.f32.mrf.mxu0
    %v246 = vpop.f32.mrf.mxu0
    %v247 = vadd.f32 %v170, %v246
    %v248 = vpop.f32.mrf.mxu0
    %249 = vdwg.mxu0
    %v250 = vld [vmem:[#allocation6] sm:$0xff]
    %v251 = vld [vmem:[#allocation8] sm:$0xff]
    %v252 = vpack.c.bf16 %v250, %v250
    %vm253 = vcmask 130048
    %v255 = vsel %vm253, %v252, 0
    %257 = vmatprep.subr.bf16.mxu0 0
    %258 = vmatpush1.bf16.msra.mxu0 0
    %259 = vmatprep.subr.bf16.mxu0 0
    %260 = vmatpush1.bf16.msra.mxu0 0
    %261 = vmatprep.subr.bf16.mxu0 0
    %262 = vmatpush1.bf16.msra.mxu0 0
    %263 = vmatprep.subr.bf16.mxu0 0
    %264 = vmatpush1.bf16.msra.mxu0 0
    %265 = vmatprep.subr.bf16.mxu0 0
    %266 = vmatpush1.bf16.msra.mxu0 0
    %267 = vmatprep.subr.bf16.mxu0 0
    %268 = vmatpush1.bf16.msra.mxu0 0
    %269 = vmatprep.subr.bf16.mxu0 0
    %270 = vmatpush1.bf16.msra.mxu0 0
    %271 = vmatprep.subr.bf16.mxu0 0
    %272 = vmatpush1.bf16.msra.mxu0 %v146
    %273 = vmatprep.subr.bf16.mxu0 0
    %274 = vmatpush2.bf16.msra.mxu0 0
    %275 = vmatprep.subr.bf16.mxu0 0
    %276 = vmatpush2.bf16.msra.mxu0 0
    %277 = vmatprep.subr.bf16.mxu0 0
    %278 = vmatpush2.bf16.msra.mxu0 0
    %279 = vmatprep.subr.bf16.mxu0 0
    %280 = vmatpush2.bf16.msra.mxu0 0
    %281 = vmatprep.subr.bf16.mxu0 0
    %282 = vmatpush2.bf16.msra.mxu0 0
    %283 = vmatprep.subr.bf16.mxu0 0
    %284 = vmatpush2.bf16.msra.mxu0 0
    %285 = vmatprep.subr.bf16.mxu0 0
    %286 = vmatpush2.bf16.msra.mxu0 0
    %287 = vmatprep.subr.bf16.mxu0 0
    %288 = vmatpush2.bf16.msra.mxu0 0
    %289 = vmatprep.mubr.bf16.mxu0 0
    %290 = vmatmul.mubr.bf16.gmra.mxu0 %v255
    %v291 = vpop.f32.mrf.mxu0
    %v292 = vadd.f32 0.0, %v291
    %v293 = vpop.f32.mrf.mxu0
    %v294 = vpop.f32.mrf.mxu0
    %v295 = vpop.f32.mrf.mxu0
    %296 = vdwg.mxu0
    %v297 = vadd.f32 %v220, %v292
    %v298 = vxor.u32 %v297, 2147483648
    %v299 = vmul.f32 %v298, 1.442695
    %v300 = vpow.pop %v299
    %v301 = vadd.f32 %v300, 1.0
    %v302 = vrcp.pop %v301
    %v303 = vmul.f32 1.0, %v302
    %v304 = vtanh.pop %v297
    %306 = vrot.lane.b32.xlu0 %v251, 16
    %v307 = vpop.permute.xlu0 %306
    %v309 = vmul.f32 %v303, %v307
    %311 = vrot.lane.b32.xlu0 %v304, 80
    %v312 = vpop.permute.xlu0 %311
    %v314 = vmul.f32 %v303, %v312
    %316 = vrot.lane.b32.xlu0 %v314, 16
    %v317 = vpop.permute.xlu0 %316
    %v319 = vadd.f32 %v309, %v317
    %v320 = vtanh.pop %v319
    %322 = vrot.lane.b32.xlu0 %v320, 16
    %v323 = vpop.permute.xlu0 %322
    %v325 = vmul.f32 %v303, %v323
    %327 = vrot.lane.b32.xlu0 %v325, 96
    %v328 = vpop.permute.xlu0 %327
    %330 = vst.msk [vmem:[#allocation2] sm:$0xff] %vm253, %v328
    %v331 = vpack.c.bf16 %v325, %v325
    %333 = vrot.lane.b32.xlu0 %v331, 96
    %v334 = vpop.permute.xlu0 %333
    %v336 = vsel %vm253, %v334, 0
    %338 = vmatprep.subr.bf16.mxu0 0
    %339 = vmatpush1.bf16.msra.mxu0 0
    %340 = vmatprep.subr.bf16.mxu0 0
    %341 = vmatpush1.bf16.msra.mxu0 0
    %342 = vmatprep.subr.bf16.mxu0 0
    %343 = vmatpush1.bf16.msra.mxu0 0
    %344 = vmatprep.subr.bf16.mxu0 0
    %345 = vmatpush1.bf16.msra.mxu0 0
    %346 = vmatprep.subr.bf16.mxu0 0
    %347 = vmatpush1.bf16.msra.mxu0 0
    %348 = vmatprep.subr.bf16.mxu0 0
    %349 = vmatpush1.bf16.msra.mxu0 0
    %350 = vmatprep.subr.bf16.mxu0 0
    %351 = vmatpush1.bf16.msra.mxu0 0
    %352 = vmatprep.subr.bf16.mxu0 0
    %353 = vmatpush1.bf16.msra.mxu0 %v146
    %354 = vmatprep.subr.bf16.mxu0 0
    %355 = vmatpush2.bf16.msra.mxu0 0
    %356 = vmatprep.subr.bf16.mxu0 0
    %357 = vmatpush2.bf16.msra.mxu0 0
    %358 = vmatprep.subr.bf16.mxu0 0
    %359 = vmatpush2.bf16.msra.mxu0 0
    %360 = vmatprep.subr.bf16.mxu0 0
    %361 = vmatpush2.bf16.msra.mxu0 0
    %362 = vmatprep.subr.bf16.mxu0 0
    %363 = vmatpush2.bf16.msra.mxu0 0
    %364 = vmatprep.subr.bf16.mxu0 0
    %365 = vmatpush2.bf16.msra.mxu0 0
    %366 = vmatprep.subr.bf16.mxu0 0
    %367 = vmatpush2.bf16.msra.mxu0 0
    %368 = vmatprep.subr.bf16.mxu0 0
    %369 = vmatpush2.bf16.msra.mxu0 0
    %370 = vmatprep.mubr.bf16.mxu0 0
    %371 = vmatmul.mubr.bf16.gmra.mxu0 %v336
    %v372 = vpop.f32.mrf.mxu0
    %v373 = vadd.f32 0.0, %v372
    %v374 = vpop.f32.mrf.mxu0
    %v375 = vpop.f32.mrf.mxu0
    %v376 = vpop.f32.mrf.mxu0
    %377 = vdwg.mxu0
    %v378 = vadd.f32 %v223, %v373
    %v379 = vxor.u32 %v378, 2147483648
    %v380 = vmul.f32 %v379, 1.442695
    %v381 = vpow.pop %v380
    %v382 = vadd.f32 %v381, 1.0
    %v383 = vrcp.pop %v382
    %v384 = vmul.f32 1.0, %v383
    %v385 = vtanh.pop %v378
    %v386 = vmul.f32 %v384, %v319
    %388 = vrot.lane.b32.xlu0 %v385, 80
    %v389 = vpop.permute.xlu0 %388
    %v391 = vmul.f32 %v384, %v389
    %393 = vrot.lane.b32.xlu0 %v391, 16
    %v394 = vpop.permute.xlu0 %393
    %v396 = vadd.f32 %v386, %v394
    %v397 = vtanh.pop %v396
    %399 = vrot.lane.b32.xlu0 %v397, 16
    %v400 = vpop.permute.xlu0 %399
    %v402 = vmul.f32 %v384, %v400
    %404 = vrot.lane.b32.xlu0 %v402, 96
    %v405 = vpop.permute.xlu0 %404
    %s407 = scalar_lea.vmem [#allocation2], 8
    %408 = vst.msk [vmem:[%s407] sm:$0xff] %vm253, %v405
    %v409 = vpack.c.bf16 %v402, %v402
    %411 = vrot.lane.b32.xlu0 %v409, 96
    %v412 = vpop.permute.xlu0 %411
    %v414 = vsel %vm253, %v412, 0
    %416 = vmatprep.subr.bf16.mxu0 0
    %417 = vmatpush1.bf16.msra.mxu0 0
    %418 = vmatprep.subr.bf16.mxu0 0
    %419 = vmatpush1.bf16.msra.mxu0 0
    %420 = vmatprep.subr.bf16.mxu0 0
    %421 = vmatpush1.bf16.msra.mxu0 0
    %422 = vmatprep.subr.bf16.mxu0 0
    %423 = vmatpush1.bf16.msra.mxu0 0
    %424 = vmatprep.subr.bf16.mxu0 0
    %425 = vmatpush1.bf16.msra.mxu0 0
    %426 = vmatprep.subr.bf16.mxu0 0
    %427 = vmatpush1.bf16.msra.mxu0 0
    %428 = vmatprep.subr.bf16.mxu0 0
    %429 = vmatpush1.bf16.msra.mxu0 0
    %430 = vmatprep.subr.bf16.mxu0 0
    %431 = vmatpush1.bf16.msra.mxu0 %v146
    %432 = vmatprep.subr.bf16.mxu0 0
    %433 = vmatpush2.bf16.msra.mxu0 0
    %434 = vmatprep.subr.bf16.mxu0 0
    %435 = vmatpush2.bf16.msra.mxu0 0
    %436 = vmatprep.subr.bf16.mxu0 0
    %437 = vmatpush2.bf16.msra.mxu0 0
    %438 = vmatprep.subr.bf16.mxu0 0
    %439 = vmatpush2.bf16.msra.mxu0 0
    %440 = vmatprep.subr.bf16.mxu0 0
    %441 = vmatpush2.bf16.msra.mxu0 0
    %442 = vmatprep.subr.bf16.mxu0 0
    %443 = vmatpush2.bf16.msra.mxu0 0
    %444 = vmatprep.subr.bf16.mxu0 0
    %445 = vmatpush2.bf16.msra.mxu0 0
    %446 = vmatprep.subr.bf16.mxu0 0
    %447 = vmatpush2.bf16.msra.mxu0 0
    %448 = vmatprep.mubr.bf16.mxu0 0
    %449 = vmatmul.mubr.bf16.gmra.mxu0 %v414
    %v450 = vpop.f32.mrf.mxu0
    %v451 = vadd.f32 0.0, %v450
    %v452 = vpop.f32.mrf.mxu0
    %v453 = vpop.f32.mrf.mxu0
    %v454 = vpop.f32.mrf.mxu0
    %455 = vdwg.mxu0
    %v456 = vadd.f32 %v228, %v451
    %v457 = vxor.u32 %v456, 2147483648
    %v458 = vmul.f32 %v457, 1.442695
    %v459 = vpow.pop %v458
    %v460 = vadd.f32 %v459, 1.0
    %v461 = vrcp.pop %v460
    %v462 = vmul.f32 1.0, %v461
    %v463 = vtanh.pop %v456
    %v464 = vmul.f32 %v462, %v396
    %466 = vrot.lane.b32.xlu0 %v463, 80
    %v467 = vpop.permute.xlu0 %466
    %v469 = vmul.f32 %v462, %v467
    %471 = vrot.lane.b32.xlu0 %v469, 16
    %v472 = vpop.permute.xlu0 %471
    %v474 = vadd.f32 %v464, %v472
    %v475 = vtanh.pop %v474
    %477 = vrot.lane.b32.xlu0 %v475, 16
    %v478 = vpop.permute.xlu0 %477
    %v480 = vmul.f32 %v462, %v478
    %482 = vrot.lane.b32.xlu0 %v480, 96
    %v483 = vpop.permute.xlu0 %482
    %s485 = scalar_lea.vmem [#allocation2], 16
    %486 = vst.msk [vmem:[%s485] sm:$0xff] %vm253, %v483
    %v487 = vpack.c.bf16 %v480, %v480
    %489 = vrot.lane.b32.xlu0 %v487, 96
    %v490 = vpop.permute.xlu0 %489
    %v492 = vsel %vm253, %v490, 0
    %494 = vmatprep.subr.bf16.mxu0 0
    %495 = vmatpush1.bf16.msra.mxu0 0
    %496 = vmatprep.subr.bf16.mxu0 0
    %497 = vmatpush1.bf16.msra.mxu0 0
    %498 = vmatprep.subr.bf16.mxu0 0
    %499 = vmatpush1.bf16.msra.mxu0 0
    %500 = vmatprep.subr.bf16.mxu0 0
    %501 = vmatpush1.bf16.msra.mxu0 0
    %502 = vmatprep.subr.bf16.mxu0 0
    %503 = vmatpush1.bf16.msra.mxu0 0
    %504 = vmatprep.subr.bf16.mxu0 0
    %505 = vmatpush1.bf16.msra.mxu0 0
    %506 = vmatprep.subr.bf16.mxu0 0
    %507 = vmatpush1.bf16.msra.mxu0 0
    %508 = vmatprep.subr.bf16.mxu0 0
    %509 = vmatpush1.bf16.msra.mxu0 %v146
    %510 = vmatprep.subr.bf16.mxu0 0
    %511 = vmatpush2.bf16.msra.mxu0 0
    %512 = vmatprep.subr.bf16.mxu0 0
    %513 = vmatpush2.bf16.msra.mxu0 0
    %514 = vmatprep.subr.bf16.mxu0 0
    %515 = vmatpush2.bf16.msra.mxu0 0
    %516 = vmatprep.subr.bf16.mxu0 0
    %517 = vmatpush2.bf16.msra.mxu0 0
    %518 = vmatprep.subr.bf16.mxu0 0
    %519 = vmatpush2.bf16.msra.mxu0 0
    %520 = vmatprep.subr.bf16.mxu0 0
    %521 = vmatpush2.bf16.msra.mxu0 0
    %522 = vmatprep.subr.bf16.mxu0 0
    %523 = vmatpush2.bf16.msra.mxu0 0
    %524 = vmatprep.subr.bf16.mxu0 0
    %525 = vmatpush2.bf16.msra.mxu0 0
    %526 = vmatprep.mubr.bf16.mxu0 0
    %527 = vmatmul.mubr.bf16.gmra.mxu0 %v492
    %v528 = vpop.f32.mrf.mxu0
    %v529 = vadd.f32 0.0, %v528
    %v530 = vpop.f32.mrf.mxu0
    %v531 = vpop.f32.mrf.mxu0
    %v532 = vpop.f32.mrf.mxu0
    %533 = vdwg.mxu0
    %v534 = vadd.f32 %v231, %v529
    %v535 = vxor.u32 %v534, 2147483648
    %v536 = vmul.f32 %v535, 1.442695
    %v537 = vpow.pop %v536
    %v538 = vadd.f32 %v537, 1.0
    %v539 = vrcp.pop %v538
    %v540 = vmul.f32 1.0, %v539
    %v541 = vtanh.pop %v534
    %v542 = vmul.f32 %v540, %v474
    %544 = vrot.lane.b32.xlu0 %v541, 80
    %v545 = vpop.permute.xlu0 %544
    %v547 = vmul.f32 %v540, %v545
    %549 = vrot.lane.b32.xlu0 %v547, 16
    %v550 = vpop.permute.xlu0 %549
    %v552 = vadd.f32 %v542, %v550
    %v553 = vtanh.pop %v552
    %555 = vrot.lane.b32.xlu0 %v553, 16
    %v556 = vpop.permute.xlu0 %555
    %v558 = vmul.f32 %v540, %v556
    %560 = vrot.lane.b32.xlu0 %v558, 96
    %v561 = vpop.permute.xlu0 %560
    %s563 = scalar_lea.vmem [#allocation2], 24
    %564 = vst.msk [vmem:[%s563] sm:$0xff] %vm253, %v561
    %v565 = vpack.c.bf16 %v558, %v558
    %567 = vrot.lane.b32.xlu0 %v565, 96
    %v568 = vpop.permute.xlu0 %567
    %v570 = vsel %vm253, %v568, 0
    %572 = vmatprep.subr.bf16.mxu0 0
    %573 = vmatpush1.bf16.msra.mxu0 0
    %574 = vmatprep.subr.bf16.mxu0 0
    %575 = vmatpush1.bf16.msra.mxu0 0
    %576 = vmatprep.subr.bf16.mxu0 0
    %577 = vmatpush1.bf16.msra.mxu0 0
    %578 = vmatprep.subr.bf16.mxu0 0
    %579 = vmatpush1.bf16.msra.mxu0 0
    %580 = vmatprep.subr.bf16.mxu0 0
    %581 = vmatpush1.bf16.msra.mxu0 0
    %582 = vmatprep.subr.bf16.mxu0 0
    %583 = vmatpush1.bf16.msra.mxu0 0
    %584 = vmatprep.subr.bf16.mxu0 0
    %585 = vmatpush1.bf16.msra.mxu0 0
    %586 = vmatprep.subr.bf16.mxu0 0
    %587 = vmatpush1.bf16.msra.mxu0 %v146
    %588 = vmatprep.subr.bf16.mxu0 0
    %589 = vmatpush2.bf16.msra.mxu0 0
    %590 = vmatprep.subr.bf16.mxu0 0
    %591 = vmatpush2.bf16.msra.mxu0 0
    %592 = vmatprep.subr.bf16.mxu0 0
    %593 = vmatpush2.bf16.msra.mxu0 0
    %594 = vmatprep.subr.bf16.mxu0 0
    %595 = vmatpush2.bf16.msra.mxu0 0
    %596 = vmatprep.subr.bf16.mxu0 0
    %597 = vmatpush2.bf16.msra.mxu0 0
    %598 = vmatprep.subr.bf16.mxu0 0
    %599 = vmatpush2.bf16.msra.mxu0 0
    %600 = vmatprep.subr.bf16.mxu0 0
    %601 = vmatpush2.bf16.msra.mxu0 0
    %602 = vmatprep.subr.bf16.mxu0 0
    %603 = vmatpush2.bf16.msra.mxu0 0
    %604 = vmatprep.mubr.bf16.mxu0 0
    %605 = vmatmul.mubr.bf16.gmra.mxu0 %v570
    %v606 = vpop.f32.mrf.mxu0
    %v607 = vadd.f32 0.0, %v606
    %v608 = vpop.f32.mrf.mxu0
    %v609 = vpop.f32.mrf.mxu0
    %v610 = vpop.f32.mrf.mxu0
    %611 = vdwg.mxu0
    %v612 = vadd.f32 %v236, %v607
    %v613 = vxor.u32 %v612, 2147483648
    %v614 = vmul.f32 %v613, 1.442695
    %v615 = vpow.pop %v614
    %v616 = vadd.f32 %v615, 1.0
    %v617 = vrcp.pop %v616
    %v618 = vmul.f32 1.0, %v617
    %v619 = vtanh.pop %v612
    %v620 = vmul.f32 %v618, %v552
    %622 = vrot.lane.b32.xlu0 %v619, 80
    %v623 = vpop.permute.xlu0 %622
    %v625 = vmul.f32 %v618, %v623
    %627 = vrot.lane.b32.xlu0 %v625, 16
    %v628 = vpop.permute.xlu0 %627
    %v630 = vadd.f32 %v620, %v628
    %v631 = vtanh.pop %v630
    %633 = vrot.lane.b32.xlu0 %v631, 16
    %v634 = vpop.permute.xlu0 %633
    %v636 = vmul.f32 %v618, %v634
    %638 = vrot.lane.b32.xlu0 %v636, 96
    %v639 = vpop.permute.xlu0 %638
    %s641 = scalar_lea.vmem [#allocation2], 32
    %642 = vst.msk [vmem:[%s641] sm:$0xff] %vm253, %v639
    %v643 = vpack.c.bf16 %v636, %v636
    %645 = vrot.lane.b32.xlu0 %v643, 96
    %v646 = vpop.permute.xlu0 %645
    %v648 = vsel %vm253, %v646, 0
    %650 = vmatprep.subr.bf16.mxu0 0
    %651 = vmatpush1.bf16.msra.mxu0 0
    %652 = vmatprep.subr.bf16.mxu0 0
    %653 = vmatpush1.bf16.msra.mxu0 0
    %654 = vmatprep.subr.bf16.mxu0 0
    %655 = vmatpush1.bf16.msra.mxu0 0
    %656 = vmatprep.subr.bf16.mxu0 0
    %657 = vmatpush1.bf16.msra.mxu0 0
    %658 = vmatprep.subr.bf16.mxu0 0
    %659 = vmatpush1.bf16.msra.mxu0 0
    %660 = vmatprep.subr.bf16.mxu0 0
    %661 = vmatpush1.bf16.msra.mxu0 0
    %662 = vmatprep.subr.bf16.mxu0 0
    %663 = vmatpush1.bf16.msra.mxu0 0
    %664 = vmatprep.subr.bf16.mxu0 0
    %665 = vmatpush1.bf16.msra.mxu0 %v146
    %666 = vmatprep.subr.bf16.mxu0 0
    %667 = vmatpush2.bf16.msra.mxu0 0
    %668 = vmatprep.subr.bf16.mxu0 0
    %669 = vmatpush2.bf16.msra.mxu0 0
    %670 = vmatprep.subr.bf16.mxu0 0
    %671 = vmatpush2.bf16.msra.mxu0 0
    %672 = vmatprep.subr.bf16.mxu0 0
    %673 = vmatpush2.bf16.msra.mxu0 0
    %674 = vmatprep.subr.bf16.mxu0 0
    %675 = vmatpush2.bf16.msra.mxu0 0
    %676 = vmatprep.subr.bf16.mxu0 0
    %677 = vmatpush2.bf16.msra.mxu0 0
    %678 = vmatprep.subr.bf16.mxu0 0
    %679 = vmatpush2.bf16.msra.mxu0 0
    %680 = vmatprep.subr.bf16.mxu0 0
    %681 = vmatpush2.bf16.msra.mxu0 0
    %682 = vmatprep.mubr.bf16.mxu0 0
    %683 = vmatmul.mubr.bf16.gmra.mxu0 %v648
    %v684 = vpop.f32.mrf.mxu0
    %v685 = vadd.f32 0.0, %v684
    %v686 = vpop.f32.mrf.mxu0
    %v687 = vpop.f32.mrf.mxu0
    %v688 = vpop.f32.mrf.mxu0
    %689 = vdwg.mxu0
    %v690 = vadd.f32 %v239, %v685
    %v691 = vxor.u32 %v690, 2147483648
    %v692 = vmul.f32 %v691, 1.442695
    %v693 = vpow.pop %v692
    %v694 = vadd.f32 %v693, 1.0
    %v695 = vrcp.pop %v694
    %v696 = vmul.f32 1.0, %v695
    %v697 = vtanh.pop %v690
    %v698 = vmul.f32 %v696, %v630
    %700 = vrot.lane.b32.xlu0 %v697, 80
    %v701 = vpop.permute.xlu0 %700
    %v703 = vmul.f32 %v696, %v701
    %705 = vrot.lane.b32.xlu0 %v703, 16
    %v706 = vpop.permute.xlu0 %705
    %v708 = vadd.f32 %v698, %v706
    %v709 = vtanh.pop %v708
    %711 = vrot.lane.b32.xlu0 %v709, 16
    %v712 = vpop.permute.xlu0 %711
    %v714 = vmul.f32 %v696, %v712
    %716 = vrot.lane.b32.xlu0 %v714, 96
    %v717 = vpop.permute.xlu0 %716
    %s719 = scalar_lea.vmem [#allocation2], 40
    %720 = vst.msk [vmem:[%s719] sm:$0xff] %vm253, %v717
    %v721 = vpack.c.bf16 %v714, %v714
    %723 = vrot.lane.b32.xlu0 %v721, 96
    %v724 = vpop.permute.xlu0 %723
    %v726 = vsel %vm253, %v724, 0
    %728 = vmatprep.subr.bf16.mxu0 0
    %729 = vmatpush1.bf16.msra.mxu0 0
    %730 = vmatprep.subr.bf16.mxu0 0
    %731 = vmatpush1.bf16.msra.mxu0 0
    %732 = vmatprep.subr.bf16.mxu0 0
    %733 = vmatpush1.bf16.msra.mxu0 0
    %734 = vmatprep.subr.bf16.mxu0 0
    %735 = vmatpush1.bf16.msra.mxu0 0
    %736 = vmatprep.subr.bf16.mxu0 0
    %737 = vmatpush1.bf16.msra.mxu0 0
    %738 = vmatprep.subr.bf16.mxu0 0
    %739 = vmatpush1.bf16.msra.mxu0 0
    %740 = vmatprep.subr.bf16.mxu0 0
    %741 = vmatpush1.bf16.msra.mxu0 0
    %742 = vmatprep.subr.bf16.mxu0 0
    %743 = vmatpush1.bf16.msra.mxu0 %v146
    %744 = vmatprep.subr.bf16.mxu0 0
    %745 = vmatpush2.bf16.msra.mxu0 0
    %746 = vmatprep.subr.bf16.mxu0 0
    %747 = vmatpush2.bf16.msra.mxu0 0
    %748 = vmatprep.subr.bf16.mxu0 0
    %749 = vmatpush2.bf16.msra.mxu0 0
    %750 = vmatprep.subr.bf16.mxu0 0
    %751 = vmatpush2.bf16.msra.mxu0 0
    %752 = vmatprep.subr.bf16.mxu0 0
    %753 = vmatpush2.bf16.msra.mxu0 0
    %754 = vmatprep.subr.bf16.mxu0 0
    %755 = vmatpush2.bf16.msra.mxu0 0
    %756 = vmatprep.subr.bf16.mxu0 0
    %757 = vmatpush2.bf16.msra.mxu0 0
    %758 = vmatprep.subr.bf16.mxu0 0
    %759 = vmatpush2.bf16.msra.mxu0 0
    %760 = vmatprep.mubr.bf16.mxu0 0
    %761 = vmatmul.mubr.bf16.gmra.mxu0 %v726
    %v762 = vpop.f32.mrf.mxu0
    %v763 = vadd.f32 0.0, %v762
    %v764 = vpop.f32.mrf.mxu0
    %v765 = vpop.f32.mrf.mxu0
    %v766 = vpop.f32.mrf.mxu0
    %767 = vdwg.mxu0
    %v768 = vadd.f32 %v244, %v763
    %v769 = vxor.u32 %v768, 2147483648
    %v770 = vmul.f32 %v769, 1.442695
    %v771 = vpow.pop %v770
    %v772 = vadd.f32 %v771, 1.0
    %v773 = vrcp.pop %v772
    %v774 = vmul.f32 1.0, %v773
    %v775 = vtanh.pop %v768
    %v776 = vmul.f32 %v774, %v708
    %778 = vrot.lane.b32.xlu0 %v775, 80
    %v779 = vpop.permute.xlu0 %778
    %v781 = vmul.f32 %v774, %v779
    %783 = vrot.lane.b32.xlu0 %v781, 16
    %v784 = vpop.permute.xlu0 %783
    %v786 = vadd.f32 %v776, %v784
    %v787 = vtanh.pop %v786
    %789 = vrot.lane.b32.xlu0 %v787, 16
    %v790 = vpop.permute.xlu0 %789
    %v792 = vmul.f32 %v774, %v790
    %794 = vrot.lane.b32.xlu0 %v792, 96
    %v795 = vpop.permute.xlu0 %794
    %s797 = scalar_lea.vmem [#allocation2], 48
    %798 = vst.msk [vmem:[%s797] sm:$0xff] %vm253, %v795
    %v799 = vpack.c.bf16 %v792, %v792
    %801 = vrot.lane.b32.xlu0 %v799, 96
    %v802 = vpop.permute.xlu0 %801
    %v804 = vsel %vm253, %v802, 0
    %806 = vmatprep.subr.bf16.mxu0 0
    %807 = vmatpush1.bf16.msra.mxu0 0
    %808 = vmatprep.subr.bf16.mxu0 0
    %809 = vmatpush1.bf16.msra.mxu0 0
    %810 = vmatprep.subr.bf16.mxu0 0
    %811 = vmatpush1.bf16.msra.mxu0 0
    %812 = vmatprep.subr.bf16.mxu0 0
    %813 = vmatpush1.bf16.msra.mxu0 0
    %814 = vmatprep.subr.bf16.mxu0 0
    %815 = vmatpush1.bf16.msra.mxu0 0
    %816 = vmatprep.subr.bf16.mxu0 0
    %817 = vmatpush1.bf16.msra.mxu0 0
    %818 = vmatprep.subr.bf16.mxu0 0
    %819 = vmatpush1.bf16.msra.mxu0 0
    %820 = vmatprep.subr.bf16.mxu0 0
    %821 = vmatpush1.bf16.msra.mxu0 %v146
    %822 = vmatprep.subr.bf16.mxu0 0
    %823 = vmatpush2.bf16.msra.mxu0 0
    %824 = vmatprep.subr.bf16.mxu0 0
    %825 = vmatpush2.bf16.msra.mxu0 0
    %826 = vmatprep.subr.bf16.mxu0 0
    %827 = vmatpush2.bf16.msra.mxu0 0
    %828 = vmatprep.subr.bf16.mxu0 0
    %829 = vmatpush2.bf16.msra.mxu0 0
    %830 = vmatprep.subr.bf16.mxu0 0
    %831 = vmatpush2.bf16.msra.mxu0 0
    %832 = vmatprep.subr.bf16.mxu0 0
    %833 = vmatpush2.bf16.msra.mxu0 0
    %834 = vmatprep.subr.bf16.mxu0 0
    %835 = vmatpush2.bf16.msra.mxu0 0
    %836 = vmatprep.subr.bf16.mxu0 0
    %837 = vmatpush2.bf16.msra.mxu0 0
    %838 = vmatprep.mubr.bf16.mxu0 0
    %839 = vmatmul.mubr.bf16.gmra.mxu0 %v804
    %v840 = vpop.f32.mrf.mxu0
    %v841 = vadd.f32 0.0, %v840
    %v842 = vpop.f32.mrf.mxu0
    %v843 = vpop.f32.mrf.mxu0
    %v844 = vpop.f32.mrf.mxu0
    %845 = vdwg.mxu0
    %v846 = vadd.f32 %v247, %v841
    %v847 = vxor.u32 %v846, 2147483648
    %v848 = vmul.f32 %v847, 1.442695
    %v849 = vpow.pop %v848
    %v850 = vadd.f32 %v849, 1.0
    %v851 = vrcp.pop %v850
    %v852 = vmul.f32 1.0, %v851
    %v853 = vtanh.pop %v846
    %v854 = vmul.f32 %v852, %v786
    %856 = vrot.lane.b32.xlu0 %v853, 80
    %v857 = vpop.permute.xlu0 %856
    %v859 = vmul.f32 %v852, %v857
    %861 = vrot.lane.b32.xlu0 %v859, 16
    %v862 = vpop.permute.xlu0 %861
    %v864 = vadd.f32 %v854, %v862
    %v865 = vtanh.pop %v864
    %867 = vrot.lane.b32.xlu0 %v865, 16
    %v868 = vpop.permute.xlu0 %867
    %v870 = vmul.f32 %v852, %v868
    %872 = vrot.lane.b32.xlu0 %v870, 96
    %v873 = vpop.permute.xlu0 %872
    %s875 = scalar_lea.vmem [#allocation2], 56
    %876 = vst.msk [vmem:[%s875] sm:$0xff] %vm253, %v873
    %v877 = vld [vmem:[#allocation12] sm:$0xff]
    %v878 = vld [vmem:[#allocation12 + $0x8] sm:$0xff]
    %v879 = vpack.c.bf16 %v878, %v877
    %v880 = vld [vmem:[#allocation2] sm:$0xff]
    %v881 = vld [vmem:[#allocation2 + $0x8] sm:$0xff]
    %v882 = vld [vmem:[#allocation2 + $0x10] sm:$0xff]
    %v883 = vld [vmem:[#allocation2 + $0x18] sm:$0xff]
    %v884 = vld [vmem:[#allocation2 + $0x20] sm:$0xff]
    %v885 = vld [vmem:[#allocation2 + $0x28] sm:$0xff]
    %v886 = vld [vmem:[#allocation2 + $0x30] sm:$0xff]
    %v887 = vld [vmem:[#allocation2 + $0x38] sm:$0xff]
    %v888 = vpack.c.bf16 %v881, %v880
    %v889 = vpack.c.bf16 %v883, %v882
    %v890 = vpack.c.bf16 %v885, %v884
    %v891 = vpack.c.bf16 %v887, %v886
    %v892 = vld [vmem:[%s7] sm:$0x1]
    %v894 = vlaneseq
    %v895 = vshrl.u32 %v894, 7
    %v896 = vsub.s32 0, %v895
    %v897 = vrot.slane %v892, %v896
    %v900 = vsel %vm253, %v888, 0
    %v903 = vsel %vm253, %v889, 0
    %v906 = vsel %vm253, %v890, 0
    %v909 = vsel %vm253, %v891, 0
    %911 = vmatprep.subr.bf16.mxu0 0
    %912 = vmatpush1.bf16.msra.mxu0 0
    %913 = vmatprep.subr.bf16.mxu0 0
    %914 = vmatpush1.bf16.msra.mxu0 0
    %915 = vmatprep.subr.bf16.mxu0 0
    %916 = vmatpush1.bf16.msra.mxu0 0
    %917 = vmatprep.subr.bf16.mxu0 0
    %918 = vmatpush1.bf16.msra.mxu0 0
    %919 = vmatprep.subr.bf16.mxu0 0
    %920 = vmatpush1.bf16.msra.mxu0 0
    %921 = vmatprep.subr.bf16.mxu0 0
    %922 = vmatpush1.bf16.msra.mxu0 0
    %923 = vmatprep.subr.bf16.mxu0 0
    %924 = vmatpush1.bf16.msra.mxu0 0
    %925 = vmatprep.subr.bf16.mxu0 0
    %926 = vmatpush1.bf16.msra.mxu0 %v879
    %927 = vmatprep.subr.bf16.mxu0 0
    %928 = vmatpush2.bf16.msra.mxu0 0
    %929 = vmatprep.subr.bf16.mxu0 0
    %930 = vmatpush2.bf16.msra.mxu0 0
    %931 = vmatprep.subr.bf16.mxu0 0
    %932 = vmatpush2.bf16.msra.mxu0 0
    %933 = vmatprep.subr.bf16.mxu0 0
    %934 = vmatpush2.bf16.msra.mxu0 0
    %935 = vmatprep.subr.bf16.mxu0 0
    %936 = vmatpush2.bf16.msra.mxu0 0
    %937 = vmatprep.subr.bf16.mxu0 0
    %938 = vmatpush2.bf16.msra.mxu0 0
    %939 = vmatprep.subr.bf16.mxu0 0
    %940 = vmatpush2.bf16.msra.mxu0 0
    %941 = vmatprep.subr.bf16.mxu0 0
    %942 = vmatpush2.bf16.msra.mxu0 0
    %943 = vmatprep.mubr.bf16.mxu0 0
    %944 = vmatmul.mubr.bf16.gmra.mxu0 %v900
    %v945 = vpop.f32.mrf.mxu0
    %v946 = vadd.f32 %v897, %v945
    %v947 = vpop.f32.mrf.mxu0
    %v948 = vpop.f32.mrf.mxu0
    %v949 = vadd.f32 %v897, %v948
    %v950 = vpop.f32.mrf.mxu0
    %951 = vmatprep.mubr.bf16.mxu0 0
    %952 = vmatmul.mubr.bf16.gmra.mxu0 %v903
    %v953 = vpop.f32.mrf.mxu0
    %v954 = vadd.f32 %v897, %v953
    %v955 = vpop.f32.mrf.mxu0
    %v956 = vpop.f32.mrf.mxu0
    %v957 = vadd.f32 %v897, %v956
    %v958 = vpop.f32.mrf.mxu0
    %959 = vmatprep.mubr.bf16.mxu0 0
    %960 = vmatmul.mubr.bf16.gmra.mxu0 %v906
    %v961 = vpop.f32.mrf.mxu0
    %v962 = vadd.f32 %v897, %v961
    %v963 = vpop.f32.mrf.mxu0
    %v964 = vpop.f32.mrf.mxu0
    %v965 = vadd.f32 %v897, %v964
    %v966 = vpop.f32.mrf.mxu0
    %967 = vmatprep.mubr.bf16.mxu0 0
    %968 = vmatmul.mubr.bf16.gmra.mxu0 %v909
    %v969 = vpop.f32.mrf.mxu0
    %v970 = vadd.f32 %v897, %v969
    %v971 = vpop.f32.mrf.mxu0
    %v972 = vpop.f32.mrf.mxu0
    %v973 = vadd.f32 %v897, %v972
    %v974 = vpop.f32.mrf.mxu0
    %975 = vdwg.mxu0
    %v976 = vmax.f32 %v946, 0.0
    %v977 = vmax.f32 %v949, 0.0
    %v978 = vmax.f32 %v954, 0.0
    %v979 = vmax.f32 %v957, 0.0
    %v980 = vmax.f32 %v962, 0.0
    %v981 = vmax.f32 %v965, 0.0
    %v982 = vmax.f32 %v970, 0.0
    %v983 = vmax.f32 %v973, 0.0
    %v984 = vlaneseq
    %v985 = vshrl.u32 %v984, 7
    %v986 = vadd.s32 %v985, 8
    %v987 = vadd.s32 %v985, 16
    %v988 = vadd.s32 %v985, 24
    %v989 = vadd.s32 %v985, 32
    %v990 = vadd.s32 %v985, 40
    %v991 = vadd.s32 %v985, 48
    %v992 = vadd.s32 %v985, 56
    %v993 = vand.u32 %v985, 7
    %v994 = vand.u32 %v986, 7
    %v995 = vand.u32 %v987, 7
    %v996 = vand.u32 %v988, 7
    %v997 = vand.u32 %v989, 7
    %v998 = vand.u32 %v990, 7
    %v999 = vand.u32 %v991, 7
    %v1000 = vand.u32 %v992, 7
    %vm1001 = vcmp.lt.s32.totalorder %v993, 2
    %vm1002 = vcmp.lt.s32.totalorder %v994, 2
    %vm1003 = vcmp.lt.s32.totalorder %v995, 2
    %vm1004 = vcmp.lt.s32.totalorder %v996, 2
    %vm1005 = vcmp.lt.s32.totalorder %v997, 2
    %vm1006 = vcmp.lt.s32.totalorder %v998, 2
    %vm1007 = vcmp.lt.s32.totalorder %v999, 2
    %vm1008 = vcmp.lt.s32.totalorder %v1000, 2
    %v1009 = vsel %vm1001, 1, 0
    %v1010 = vsel %vm1002, 1, 0
    %v1011 = vsel %vm1003, 1, 0
    %v1012 = vsel %vm1004, 1, 0
    %v1013 = vsel %vm1005, 1, 0
    %v1014 = vsel %vm1006, 1, 0
    %v1015 = vsel %vm1007, 1, 0
    %v1016 = vsel %vm1008, 1, 0
    %v1017 = vcvt.s32.f32 %v1009
    %v1018 = vcvt.s32.f32 %v1010
    %v1019 = vcvt.s32.f32 %v1011
    %v1020 = vcvt.s32.f32 %v1012
    %v1021 = vcvt.s32.f32 %v1013
    %v1022 = vcvt.s32.f32 %v1014
    %v1023 = vcvt.s32.f32 %v1015
    %v1024 = vcvt.s32.f32 %v1016
    %v1025 = vmul.f32 %v976, %v1017
    %v1026 = vmul.f32 %v977, %v1018
    %v1027 = vmul.f32 %v978, %v1019
    %v1028 = vmul.f32 %v979, %v1020
    %v1029 = vmul.f32 %v980, %v1021
    %v1030 = vmul.f32 %v981, %v1022
    %v1031 = vmul.f32 %v982, %v1023
    %v1032 = vmul.f32 %v983, %v1024
    %v1033 = vsel %vm253, %v1025, 0.0
    %v1034 = vsel %vm253, %v1026, 0.0
    %v1035 = vadd.f32 %v1033, %v1034
    %v1036 = vsel %vm253, %v1027, 0.0
    %v1037 = vadd.f32 %v1035, %v1036
    %v1038 = vsel %vm253, %v1028, 0.0
    %v1039 = vadd.f32 %v1037, %v1038
    %v1040 = vsel %vm253, %v1029, 0.0
    %v1041 = vadd.f32 %v1039, %v1040
    %v1042 = vsel %vm253, %v1030, 0.0
    %v1043 = vadd.f32 %v1041, %v1042
    %v1044 = vsel %vm253, %v1031, 0.0
    %v1045 = vadd.f32 %v1043, %v1044
    %v1046 = vsel %vm253, %v1032, 0.0
    %v1047 = vadd.f32 %v1045, %v1046
    %v1048 = vrot.slane %v1047, 4
    %v1049 = vadd.f32 %v1047, %v1048
    %v1050 = vrot.slane %v1049, 2
    %v1051 = vadd.f32 %v1049, %v1050
    %v1052 = vrot.slane %v1051, 1
    %v1053 = vadd.f32 %v1051, %v1052
    %v1054 = vmul.f32 %v1053, 0.0625
    %v1055 = vmul.f32 %v1025, %v1025
    %v1056 = vmul.f32 %v1026, %v1026
    %v1057 = vmul.f32 %v1027, %v1027
    %v1058 = vmul.f32 %v1028, %v1028
    %v1059 = vmul.f32 %v1029, %v1029
    %v1060 = vmul.f32 %v1030, %v1030
    %v1061 = vmul.f32 %v1031, %v1031
    %v1062 = vmul.f32 %v1032, %v1032
    %v1063 = vsel %vm253, %v1055, 0.0
    %v1064 = vsel %vm253, %v1056, 0.0
    %v1065 = vadd.f32 %v1063, %v1064
    %v1066 = vsel %vm253, %v1057, 0.0
    %v1067 = vadd.f32 %v1065, %v1066
    %v1068 = vsel %vm253, %v1058, 0.0
    %v1069 = vadd.f32 %v1067, %v1068
    %v1070 = vsel %vm253, %v1059, 0.0
    %v1071 = vadd.f32 %v1069, %v1070
    %v1072 = vsel %vm253, %v1060, 0.0
    %v1073 = vadd.f32 %v1071, %v1072
    %v1074 = vsel %vm253, %v1061, 0.0
    %v1075 = vadd.f32 %v1073, %v1074
    %v1076 = vsel %vm253, %v1062, 0.0
    %v1077 = vadd.f32 %v1075, %v1076
    %v1078 = vrot.slane %v1077, 4
    %v1079 = vadd.f32 %v1077, %v1078
    %v1080 = vrot.slane %v1079, 2
    %v1081 = vadd.f32 %v1079, %v1080
    %v1082 = vrot.slane %v1081, 1
    %v1083 = vadd.f32 %v1081, %v1082
    %v1084 = vmul.f32 %v1083, 0.0625
    %v1085 = vmul.f32 %v1054, %v1054
    %v1086 = vsub.f32 %v1084, %v1085
    %v1087 = vmax.f32 %v1086, 0.0
    %v1088 = vsub.f32 %v983, %v1054
    %v1089 = vadd.f32 %v1087, 1e-05
    %v1090 = vrsqrt.pop %v1089
    %v1091 = vmul.f32 %v1088, %v1090
    %v1092 = vld [vmem:[#allocation14] sm:$0x1]
    %v1094 = vlaneseq
    %v1095 = vshrl.u32 %v1094, 7
    %v1096 = vsub.s32 0, %v1095
    %v1097 = vrot.slane %v1092, %v1096
    %v1099 = vmul.f32 %v1091, %v1097
    %v1100 = vld [vmem:[#allocation15] sm:$0x1]
    %v1102 = vlaneseq
    %v1103 = vshrl.u32 %v1102, 7
    %v1104 = vsub.s32 0, %v1103
    %v1105 = vrot.slane %v1100, %v1104
    %v1107 = vadd.f32 %v1099, %v1105
    %v1108 = vpack.c.bf16 %v1107, %v1107
    %v1109 = vld [vmem:[%s10] sm:$0xff]
    %v1110 = vld [vmem:[%s10 + $0x8] sm:$0xff]
    %v1111 = vpack.c.bf16 %v1110, %v1109
    %v1112 = vld [vmem:[%s11] sm:$0x1]
    %v1114 = vlaneseq
    %v1115 = vshrl.u32 %v1114, 7
    %v1116 = vsub.s32 0, %v1115
    %v1117 = vrot.slane %v1112, %v1116
    %v1120 = vsel %vm253, %v1108, 0
    %1122 = vmatprep.subr.bf16.mxu0 0
    %1123 = vmatpush1.bf16.msra.mxu0 0
    %1124 = vmatprep.subr.bf16.mxu0 0
    %1125 = vmatpush1.bf16.msra.mxu0 0
    %1126 = vmatprep.subr.bf16.mxu0 0
    %1127 = vmatpush1.bf16.msra.mxu0 0
    %1128 = vmatprep.subr.bf16.mxu0 0
    %1129 = vmatpush1.bf16.msra.mxu0 0
    %1130 = vmatprep.subr.bf16.mxu0 0
    %1131 = vmatpush1.bf16.msra.mxu0 0
    %1132 = vmatprep.subr.bf16.mxu0 0
    %1133 = vmatpush1.bf16.msra.mxu0 0
    %1134 = vmatprep.subr.bf16.mxu0 0
    %1135 = vmatpush1.bf16.msra.mxu0 0
    %1136 = vmatprep.subr.bf16.mxu0 0
    %1137 = vmatpush1.bf16.msra.mxu0 %v1111
    %1138 = vmatprep.subr.bf16.mxu0 0
    %1139 = vmatpush2.bf16.msra.mxu0 0
    %1140 = vmatprep.subr.bf16.mxu0 0
    %1141 = vmatpush2.bf16.msra.mxu0 0
    %1142 = vmatprep.subr.bf16.mxu0 0
    %1143 = vmatpush2.bf16.msra.mxu0 0
    %1144 = vmatprep.subr.bf16.mxu0 0
    %1145 = vmatpush2.bf16.msra.mxu0 0
    %1146 = vmatprep.subr.bf16.mxu0 0
    %1147 = vmatpush2.bf16.msra.mxu0 0
    %1148 = vmatprep.subr.bf16.mxu0 0
    %1149 = vmatpush2.bf16.msra.mxu0 0
    %1150 = vmatprep.subr.bf16.mxu0 0
    %1151 = vmatpush2.bf16.msra.mxu0 0
    %1152 = vmatprep.subr.bf16.mxu0 0
    %1153 = vmatpush2.bf16.msra.mxu0 0
    %1154 = vmatprep.mubr.bf16.mxu0 0
    %1155 = vmatmul.mubr.bf16.gmra.mxu0 %v1120
    %v1156 = vpop.f32.mrf.mxu0
    %v1157 = vadd.f32 %v1117, %v1156
    %v1158 = vpop.f32.mrf.mxu0
    %v1159 = vpop.f32.mrf.mxu0
    %v1160 = vpop.f32.mrf.mxu0
    %1161 = vdwg.mxu0
    %v1162 = vxor.u32 %v1157, 2147483648
    %v1163 = vmul.f32 %v1162, 1.442695
    %v1164 = vpow.pop %v1163
    %v1165 = vadd.f32 %v1164, 1.0
    %v1166 = vrcp.pop %v1165
    %v1167 = vmul.f32 1.0, %v1166
    %1168 = vst [vmem:[#allocation17] sm:$0xff] %v1167
    // Predicated region
    $region82: #{tpu_custom_call.1} parent=1 // pred_check
      _
    $region83: #{tpu_custom_call.1} parent=1 // pred_check_branch
      %1170 = sbr.rel (0) target = $region85
    $region84: #{tpu_custom_call.1} parent=1 // pred_region
      %s1172 = ssub.s32 128, 128
      %1173 = vsyncadd [#allocation5], %s1172
      %s1175 = sshll.u32 [#allocation17], 4
      %s1176 = int_to_ptr.vmem [resolvable:$true] %s1175
      %1178 = dma.vmem_to_hbm [thread:$0]  %s1176, 128, %s12, [#allocation5]
    $region85: #{tpu_custom_call.1} parent=1 // pred_fallthru
      _
    // Predicated region
    $region86: #{tpu_custom_call.1} parent=1 // pred_check
      _
    $region87: #{tpu_custom_call.1} parent=1 // pred_check_branch
      %1180 = sbr.rel (0) target = $region89
    $region88: #{tpu_custom_call.1} parent=1 // pred_region
      %1181 = dma.done [#allocation5], 128
    $region89: #{tpu_custom_call.1} parent=1 // pred_fallthru
      _
    %1182 = vsyncpa [#allocation4], 1
    %1183 = vsyncpa [#allocation7], 1
    %1184 = vsyncpa [#allocation10], 1
    %1185 = vsyncpa [#allocation13], 1
    %1186 = vsyncpa [#allocation16], 1
    %1187 = vsyncpa [#allocation5], 1

</llo_original>
